<compile_context>
chip_gen: v7x
topology: tpu7x:2x2x1
jax: 0.10.0
libtpu: 0.0.40
codegen_flags: <defaults>
</compile_context>

<pallas_src>
import functools

import jax
import jax.numpy as jnp
from jax import lax
from jax.experimental import pallas as pl
from jax.experimental.pallas import tpu as pltpu


def _round_up(x, m):
    return ((x + m - 1) // m) * m


def _pad_gate_cols(m, h, hp):
    """(rows, 3*h) -> (rows, 3*hp): zero-pad each gate's columns to hp lanes."""
    rows = m.shape[0]
    m3 = m.reshape(rows, 3, h)
    m3 = jnp.pad(m3, ((0, 0), (0, 0), (0, hp - h)))
    return m3.reshape(rows, 3 * hp)


def _default_compute_dtype():
    # bf16 matmul inputs are MXU-native on TPU (v5e/v6e/v7x).  On non-TPU
    # backends (e.g. CPU interpret runs) fall back to f32: XLA:CPU's DotThunk
    # does not implement BF16 x BF16 = F32 (the previous version's crash).
    try:
        if jax.default_backend() == "tpu":
            return jnp.bfloat16
    except Exception:
        pass
    return jnp.float32


def _vmem_limit(nbytes):
    # 2x headroom over the actual double-buffered block footprint, clamped so
    # it stays valid on v7x (64 MiB physical per TensorCore).
    return int(min(max(2 * nbytes, 16 * 1024 * 1024), 64 * 1024 * 1024))


# --------------------------- GRU recurrence kernel ---------------------------
def _gru_recurrent_kernel(gi_ref, whh_ref, bhn_ref, out_ref, h_ref, *, tb, hp):
    """Time-blocked GRU recurrence.

    Grid = (batch_blocks ["parallel"], time_blocks ["arbitrary", sequential]).

    gi_ref  : (TB, BB, 3*Hp) f32/bf16  precomputed x @ W_ih^T + (b_ih [+ b_hr|b_hz])
                                       gate order [r|z|n]
    whh_ref : (Hp, 3*Hp)     bf16/f32  hidden weights, pre-transposed, gate/lane padded
    bhn_ref : (1, Hp)        f32       n-gate hidden bias only (r/z folded into gi)
    out_ref : (TB, BB, Hp)   f32       hidden state per timestep of this block
    h_ref   : (BB, Hp)       f32       VMEM scratch carrying h across time blocks
    """
    @pl.when(pl.program_id(1) == 0)     # new batch block -> fresh sequence, h0 = 0
    def _():
        h_ref[...] = jnp.zeros_like(h_ref)

    wdt = whh_ref.dtype

    def step(i, h):
        gi = gi_ref[i].astype(jnp.float32)                          # (BB, 3*Hp)
        gh = jnp.dot(h.astype(wdt), whh_ref[...],
                     preferred_element_type=jnp.float32)
        # Hp % 128 == 0, so every gate slice is lane-tile aligned.
        r = jax.nn.sigmoid(gi[:, 0 * hp:1 * hp] + gh[:, 0 * hp:1 * hp])
        z = jax.nn.sigmoid(gi[:, 1 * hp:2 * hp] + gh[:, 1 * hp:2 * hp])
        n = jnp.tanh(gi[:, 2 * hp:3 * hp] + r * (gh[:, 2 * hp:3 * hp] + bhn_ref[...]))
        h_new = (1.0 - z) * n + z * h
        out_ref[i] = h_new.astype(out_ref.dtype)                    # (8k,128m) tile store
        return h_new

    h_ref[...] = lax.fori_loop(0, tb, step, h_ref[...], unroll=True)


def _gru_layer_pallas(gi_tm, whh_t, bhn, *, time_block=32, batch_block=None):
    """gi_tm: (T, Bp, 3*Hp) time-major precomputed input projection (f32 or bf16).
    Returns (T, Bp, Hp) f32 time-major hidden states."""
    T, Bp, three_hp = gi_tm.shape
    hp = three_hp // 3

    # Prefer a time block that divides T exactly (no dead padded timesteps).
    tb = min(time_block, T)
    if T % tb != 0:
        for cand in range(tb, max(tb // 2, 1) - 1, -1):
            if T % cand == 0:
                tb = cand
                break
    n_t = pl.cdiv(T, tb)
    t_pad = n_t * tb
    if t_pad != T:
        # Trailing pad timesteps are harmless: outputs sliced off, h reset at
        # the next batch block.
        gi_tm = jnp.pad(gi_tm, ((0, t_pad - T), (0, 0), (0, 0)))

    bb = Bp if batch_block is None else batch_block
    assert Bp % bb == 0 and bb % 8 == 0, (Bp, bb)
    n_b = Bp // bb

    gi_isz = gi_tm.dtype.itemsize
    w_isz = whh_t.dtype.itemsize
    block_bytes = (2 * tb * bb * three_hp * gi_isz        # gi (double-buffered)
                   + 2 * tb * bb * hp * 4                 # out
                   + 2 * hp * three_hp * w_isz            # W_hh
                   + 2 * hp * 4                           # b_hn
                   + bb * hp * 4)                         # h scratch

    cost = pl.CostEstimate(
        flops=2 * t_pad * Bp * hp * three_hp + 12 * t_pad * Bp * hp,
        transcendentals=3 * t_pad * Bp * hp,
        bytes_accessed=int(gi_tm.size * gi_isz + t_pad * Bp * hp * 4
                           + whh_t.size * w_isz + bhn.size * 4))

    out = pl.pallas_call(
        functools.partial(_gru_recurrent_kernel, tb=tb, hp=hp),
        out_shape=jax.ShapeDtypeStruct((t_pad, Bp, hp), jnp.float32),
        grid=(n_b, n_t),
        in_specs=[
            pl.BlockSpec((tb, bb, three_hp), lambda b, t: (t, b, 0)),
            # Constant-index weight / bias blocks stay VMEM-resident across the
            # whole grid (only re-fetched when the block index changes).
            pl.BlockSpec((hp, three_hp), lambda b, t: (0, 0)),
            pl.BlockSpec((1, hp), lambda b, t: (0, 0)),
        ],
        out_specs=pl.BlockSpec((tb, bb, hp), lambda b, t: (t, b, 0)),
        scratch_shapes=[pltpu.VMEM((bb, hp), jnp.float32)],
        compiler_params=pltpu.CompilerParams(
            # batch blocks are independent (megacore-shardable on v7x);
            # the time axis is the sequential recurrence.
            dimension_semantics=("parallel", "arbitrary"),
            vmem_limit_bytes=_vmem_limit(block_bytes)),
        cost_estimate=cost,
    )(gi_tm, whh_t, bhn)
    return out[:T] if t_pad != T else out


# ------------------- self-attention pooling + l2normalize --------------------
def _attn_l2norm_kernel(x_ref, wa_ref, ba_ref, u_ref, bu_ref, o_ref):
    """alpha = softmax_t(U(tanh(W x + b_w)) + b_u);  out = l2norm(sum_t alpha * x).

    Per batch block:
      x_ref  : (T, bb, Hp) f32 time-major GRU outputs (padded lanes are zero)
      wa_ref : (Hp, A) compute dtype,  ba_ref: (1, A) f32,
      u_ref  : (1, A) f32,  bu_ref: (1, 1) f32
      o_ref  : (bb, Hp) f32
    """
    T, bb, hp = x_ref.shape
    cdt = wa_ref.dtype
    x = x_ref[...]                                                # (T, bb, Hp) f32
    # (T*bb, Hp): merging leading dims is layout-free since bb % 8 == 0.
    x2d = x.reshape(T * bb, hp)
    hid = jnp.tanh(jnp.dot(x2d.astype(cdt), wa_ref[...],
                           preferred_element_type=jnp.float32) + ba_ref[...])
    scores = jnp.sum(hid * u_ref[...], axis=-1, keepdims=True) + bu_ref[...]
    scores = scores.reshape(T, bb, 1)                             # split leading dim
    m = jnp.max(scores, axis=0, keepdims=True)
    e = jnp.exp(scores - m)
    alpha = e / jnp.sum(e, axis=0, keepdims=True)                 # softmax over time
    pooled = jnp.sum(alpha * x, axis=0)                           # (bb, Hp)
    nrm = jnp.sqrt(jnp.sum(pooled * pooled, axis=-1, keepdims=True))
    o_ref[...] = (pooled / jnp.maximum(nrm, 1e-12)).astype(o_ref.dtype)


def _pick_attn_batch_block(Bp, requested=None, max_bb=32):
    if requested is not None:
        assert Bp % requested == 0 and requested % 8 == 0, (Bp, requested)
        return requested
    for cand in range(min(max_bb, Bp), 7, -8):
        if Bp % cand == 0:
            return cand
    return Bp


def _attn_l2norm_pallas(x_tm, wa_t, ba, u, bu, *, batch_block=None):
    T, Bp, Hp = x_tm.shape
    A = wa_t.shape[1]
    bb = _pick_attn_batch_block(Bp, batch_block)
    n_b = Bp // bb

    w_isz = wa_t.dtype.itemsize
    block_bytes = (2 * T * bb * Hp * 4 + 2 * Hp * A * w_isz
                   + 4 * A * 4 + 2 * bb * Hp * 4)

    cost = pl.CostEstimate(
        flops=2 * T * Bp * Hp * A + 8 * T * Bp * A + 4 * T * Bp * Hp,
        transcendentals=T * Bp * A + 2 * T * Bp,
        bytes_accessed=int(x_tm.size * 4 + wa_t.size * w_isz + Bp * Hp * 4))

    return pl.pallas_call(
        _attn_l2norm_kernel,
        out_shape=jax.ShapeDtypeStruct((Bp, Hp), jnp.float32),
        grid=(n_b,),
        in_specs=[
            pl.BlockSpec((T, bb, Hp), lambda i: (0, i, 0)),
            pl.BlockSpec((Hp, A), lambda i: (0, 0)),
            pl.BlockSpec((1, A), lambda i: (0, 0)),
            pl.BlockSpec((1, A), lambda i: (0, 0)),
            pl.BlockSpec((1, 1), lambda i: (0, 0)),
        ],
        out_specs=pl.BlockSpec((bb, Hp), lambda i: (i, 0)),
        compiler_params=pltpu.CompilerParams(
            dimension_semantics=("parallel",),
            vmem_limit_bytes=_vmem_limit(block_bytes)),
        cost_estimate=cost,
    )(x_tm, wa_t, ba, u, bu)


# --------------------------------- the model ---------------------------------
class TextEncoderPallas:
    """JAX/Pallas port of TextEncoder: Embed -> Dropout -> GRU -> SelfAttention -> l2norm."""

    def __init__(self, size_feature, size, size_embed=64, depth=1,
                 size_attn=512, dropout_p=0.0, seed=0, compute_dtype=None):
        self.size_feature = size_feature
        self.size = size
        self.size_embed = size_embed
        self.depth = depth
        self.size_attn = size_attn
        self.dropout_p = dropout_p
        # TODO(synk): dropout_p > 0 (stochastic mask) not implemented; p=0.0 is identity.
        self.compute_dtype = (_default_compute_dtype()
                              if compute_dtype is None else compute_dtype)
        cdt = self.compute_dtype
        self.hp = max(128, _round_up(size, 128))          # lane-aligned hidden width
        self.ep = max(128, _round_up(size_embed, 128))    # lane-aligned embed width

        key = jax.random.PRNGKey(seed)
        key, ke = jax.random.split(key)
        embed = jax.random.normal(ke, (size_feature, size_embed), jnp.float32)
        self.embed_raw = embed
        # Zero-padded embed columns -> layer-0 GEMM contracts over a full lane tile.
        self.embed = jnp.pad(embed, ((0, 0), (0, self.ep - size_embed)))

        # ---- GRU params (PyTorch layout: W_ih (3H, D_in), gate order [r|z|n]) ----
        k = 1.0 / (size ** 0.5)
        self.gru_params_raw = []
        self.gru_params = []
        for layer in range(depth):
            d_in = size_embed if layer == 0 else size
            key, k1, k2, k3, k4 = jax.random.split(key, 5)
            w_ih = jax.random.uniform(k1, (3 * size, d_in), jnp.float32, -k, k)
            w_hh = jax.random.uniform(k2, (3 * size, size), jnp.float32, -k, k)
            b_ih = jax.random.uniform(k3, (3 * size,), jnp.float32, -k, k)
            b_hh = jax.random.uniform(k4, (3 * size,), jnp.float32, -k, k)
            self.gru_params_raw.append((w_ih, w_hh, b_ih, b_hh))

            # Kernel params: pre-transposed, gate columns padded to Hp lanes with
            # zeros (so padded h lanes stay exactly 0), weights in compute dtype.
            wih_t = w_ih.T                                         # (d_in, 3H)
            if layer == 0:
                wih_t = jnp.pad(wih_t, ((0, self.ep - size_embed), (0, 0)))
            else:                                                  # input is padded h
                wih_t = jnp.pad(wih_t, ((0, self.hp - size), (0, 0)))
            wih_t = _pad_gate_cols(wih_t, size, self.hp).astype(cdt)
            whh_t = _pad_gate_cols(jnp.pad(w_hh.T, ((0, self.hp - size), (0, 0))),
                                   size, self.hp).astype(cdt)
            # Fold b_hr/b_hz into the hoisted bias; keep only b_hn for the recurrence
            # (it sits inside the r-gated term so it cannot be hoisted).
            b_fold = b_ih.at[:2 * size].add(b_hh[:2 * size])
            bih = _pad_gate_cols(b_fold.reshape(1, -1), size, self.hp)       # (1,3Hp) f32
            bhn = jnp.pad(b_hh[2 * size:], (0, self.hp - size)).reshape(1, -1)  # (1,Hp) f32
            self.gru_params.append((wih_t, whh_t, bih, bhn))

        # ---- SelfAttention (vg.attention.SelfAttention):
        #      alpha = softmax_t(Linear(A,1)(tanh(Linear(H,A)(x)))) ; pooled = sum_t alpha*x
        ka = 1.0 / (size ** 0.5)
        ku = 1.0 / (size_attn ** 0.5)
        key, k1, k2, k3, k4 = jax.random.split(key, 5)
        wa = jax.random.uniform(k1, (size_attn, size), jnp.float32, -ka, ka)
        ba = jax.random.uniform(k2, (size_attn,), jnp.float32, -ka, ka)
        u = jax.random.uniform(k3, (1, size_attn), jnp.float32, -ku, ku)
        bu = jax.random.uniform(k4, (1,), jnp.float32, -ku, ku)
        self.attn_params_raw = (wa, ba, u, bu)
        self.wa_t = jnp.pad(wa.T, ((0, self.hp - size), (0, 0))).astype(cdt)  # (Hp, A)
        self.ba = ba.reshape(1, -1)
        self.u = u                                                 # (1, A) f32
        self.bu = bu.reshape(1, 1)

    def __call__(self, text, *, time_block=32, batch_block=None,
                 attn_batch_block=None):
        """text: (B, T) int token ids -> (B, size) L2-normalized encodings."""
        B, T = text.shape
        Bp = _round_up(B, 8)
        cdt = self.compute_dtype

        # 1) Embedding lookup (data-dependent gather -> plain XLA) + dropout(p=0)=id.
        emb = jnp.take(self.embed, text, axis=0)                  # (B, T, Ep) f32
        if Bp != B:
            emb = jnp.pad(emb, ((0, Bp - B), (0, 0), (0, 0)))

        h_tm = None
        for layer, (wih_t, whh_t, bih, bhn) in enumerate(self.gru_params):
            # 2) Hoisted input projection: one MXU-friendly GEMM over ALL timesteps
            #    (biases folded in), emitted directly time-major so the recurrent
            #    kernel never needs a standalone activation transpose.  Stored in
            #    the compute dtype to halve the HBM stream feeding the recurrence.
            if layer == 0:
                gi = jnp.einsum('bte,eg->tbg', emb.astype(cdt), wih_t,
                                preferred_element_type=jnp.float32) + bih
            else:
                gi = jnp.einsum('tbh,hg->tbg', h_tm.astype(cdt), wih_t,
                                preferred_element_type=jnp.float32) + bih
            gi = gi.astype(cdt)
            # 3) Sequential recurrence (only h @ W_hh^T per step) in Pallas.
            h_tm = _gru_layer_pallas(gi, whh_t, bhn,
                                     time_block=time_block,
                                     batch_block=batch_block)
        # 4) Fused self-attention pooling + L2 normalization kernel (batch-tiled).
        pooled = _attn_l2norm_pallas(h_tm, self.wa_t, self.ba, self.u, self.bu,
                                     batch_block=attn_batch_block)
        return pooled[:B, :self.size]


# ----------------------- pure-JAX reference (module semantics) ---------------
def _forward_ref(model, text):
    H = model.size
    emb = jnp.take(model.embed_raw, text, axis=0)                 # (B, T, E) f32
    B = emb.shape[0]
    x = emb
    for w_ih, w_hh, b_ih, b_hh in model.gru_params_raw:
        gi_all = (jnp.einsum('btd,dg->tbg', x, w_ih.T)
                  + b_ih.reshape(1, 1, -1))                       # (T, B, 3H) f32

        def step(h, gi_t):
            gh = h @ w_hh.T + b_hh.reshape(1, -1)
            r = jax.nn.sigmoid(gi_t[:, :H] + gh[:, :H])
            z = jax.nn.sigmoid(gi_t[:, H:2 * H] + gh[:, H:2 * H])
            n = jnp.tanh(gi_t[:, 2 * H:] + r * gh[:, 2 * H:])
            h_new = (1.0 - z) * n + z * h
            return h_new, h_new

        h0 = jnp.zeros((B, H), jnp.float32)
        _, out_tm = lax.scan(step, h0, gi_all)                    # (T, B, H)
        x = jnp.transpose(out_tm, (1, 0, 2))                      # (B, T, H)

    wa, ba, u, bu = model.attn_params_raw
    hid = jnp.tanh(jnp.einsum('bth,ah->bta', x, wa) + ba)         # (B, T, A)
    scores = jnp.sum(hid * u.reshape(1, 1, -1), axis=-1) + bu[0]  # (B, T)
    alpha = jax.nn.softmax(scores, axis=1)[..., None]             # (B, T, 1)
    pooled = jnp.sum(alpha * x, axis=1)                           # (B, H)
    nrm = jnp.sqrt(jnp.sum(pooled * pooled, axis=1, keepdims=True))
    return pooled / jnp.maximum(nrm, 1e-12)


if __name__ == "__main__":
    batch, seq = 2, 8
    size_feature, size, size_embed, depth, size_attn = 50, 32, 64, 1, 512

    model = TextEncoderPallas(size_feature, size, size_embed=size_embed,
                              depth=depth, size_attn=size_attn,
                              dropout_p=0.0, seed=0)

    key = jax.random.PRNGKey(0)
    text = jax.random.randint(key, (batch, seq), 0, size_feature, dtype=jnp.int32)

    out = jax.block_until_ready(model(text, time_block=32))
    assert out.shape == (batch, size), out.shape

    ref = jax.block_until_ready(_forward_ref(model, text))
    # Reference is pure f32; loosen tolerance when the kernel path runs bf16 MXU.
    tol = 2e-3 if jnp.dtype(model.compute_dtype) == jnp.dtype(jnp.float32) else 2e-2
    max_err = float(jnp.max(jnp.abs(out - ref)))
    if not (max_err < tol):
        raise AssertionError(f"mismatch vs reference, max_err={max_err}")

    print("KERNEL_OK")
</pallas_src>

<mosaic_0001>
module attributes {stable_mosaic.version = 11 : i64} {
  func.func @_gru_recurrent_kernel(%arg0: i32, %arg1: i32, %arg2: memref<8x8x384xf32, #tpu.memory_space<vmem>>, %arg3: memref<128x384xf32, #tpu.memory_space<vmem>>, %arg4: memref<1x128xf32, #tpu.memory_space<vmem>>, %arg5: memref<8x8x128xf32, #tpu.memory_space<vmem>>, %arg6: memref<8x128xf32, #tpu.memory_space<vmem>>) attributes {dimension_semantics = [#tpu.dimension_semantics<parallel>, #tpu.dimension_semantics<arbitrary>], iteration_bounds = array<i64: 1, 1>, scalar_prefetch = 0 : i64, scratch_operands = 1 : i64, tpu.core_type = #tpu.core_type<tc>, window_params = [{transform_indices = @transform_0, window_bounds = array<i64: 8, 8, 384>}, {pipeline_mode = #tpu.pipeline_mode<synchronous>, transform_indices = @transform_1, window_bounds = array<i64: 128, 384>}, {pipeline_mode = #tpu.pipeline_mode<synchronous>, transform_indices = @transform_2, window_bounds = array<i64: 1, 128>}, {transform_indices = @transform_3, window_bounds = array<i64: 8, 8, 128>}]} {
    %c0_i32 = arith.constant 0 : i32
    %0 = arith.cmpi eq, %arg1, %c0_i32 : i32
    %1 = arith.extui %0 : i1 to i32
    %c0_i32_0 = arith.constant 0 : i32
    %2 = arith.cmpi ne, %1, %c0_i32_0 : i32
    scf.if %2 {
      %cst_100 = arith.constant 0.000000e+00 : f32
      %309 = vector.broadcast %cst_100 : f32 to vector<8x128xf32>
      %c0_101 = arith.constant 0 : index
      %c0_102 = arith.constant 0 : index
      %310 = vector.load %arg6[%c0_101, %c0_102] : memref<8x128xf32, #tpu.memory_space<vmem>>, vector<8x128xf32>
      tpu.vector_store %arg6[%c0_101, %c0_102], %309 {strides = array<i32>} : memref<8x128xf32, #tpu.memory_space<vmem>>, vector<8x128xf32>,
    } else {
    }
    %c0 = arith.constant 0 : index
    %c0_1 = arith.constant 0 : index
    %3 = vector.load %arg6[%c0, %c0_1] : memref<8x128xf32, #tpu.memory_space<vmem>>, vector<8x128xf32>
    %c0_i32_2 = arith.constant 0 : i32
    %4 = arith.index_cast %c0_i32_2 : i32 to index
    %c0_3 = arith.constant 0 : index
    %c0_4 = arith.constant 0 : index
    %5 = vector.load %arg2[%4, %c0_3, %c0_4] : memref<8x8x384xf32, #tpu.memory_space<vmem>>, vector<1x8x384xf32>
    %6 = vector.shape_cast %5 : vector<1x8x384xf32> to vector<8x384xf32>
    %c0_5 = arith.constant 0 : index
    %c0_6 = arith.constant 0 : index
    %7 = vector.load %arg3[%c0_5, %c0_6] : memref<128x384xf32, #tpu.memory_space<vmem>>, vector<128x384xf32>
    %cst = arith.constant dense<0.000000e+00> : vector<8x384xf32>
    %8 = tpu.matmul %3, %7, %cst {dimension_numbers = #tpu.dot_dimension_numbers<[1], [0], [0], [1], [0, 0, 1, 1], [], []>} : vector<8x128xf32>, vector<128x384xf32>, vector<8x384xf32> -> vector<8x384xf32>
    %9 = vector.extract_strided_slice %6 {offsets = [0, 0], sizes = [8, 128], strides = [1, 1]} : vector<8x384xf32> to vector<8x128xf32>
    %10 = vector.extract_strided_slice %8 {offsets = [0, 0], sizes = [8, 128], strides = [1, 1]} : vector<8x384xf32> to vector<8x128xf32>
    %11 = arith.addf %9, %10 : vector<8x128xf32>
    %12 = arith.negf %11 : vector<8x128xf32>
    %13 = math.exp %12 : vector<8x128xf32>
    %cst_7 = arith.constant 1.000000e+00 : f32
    %14 = vector.broadcast %cst_7 : f32 to vector<8x128xf32>
    %15 = arith.addf %14, %13 : vector<8x128xf32>
    %16 = arith.divf %14, %15 : vector<8x128xf32>
    %17 = vector.extract_strided_slice %6 {offsets = [0, 128], sizes = [8, 128], strides = [1, 1]} : vector<8x384xf32> to vector<8x128xf32>
    %18 = vector.extract_strided_slice %8 {offsets = [0, 128], sizes = [8, 128], strides = [1, 1]} : vector<8x384xf32> to vector<8x128xf32>
    %19 = arith.addf %17, %18 : vector<8x128xf32>
    %20 = arith.negf %19 : vector<8x128xf32>
    %21 = math.exp %20 : vector<8x128xf32>
    %cst_8 = arith.constant 1.000000e+00 : f32
    %22 = vector.broadcast %cst_8 : f32 to vector<8x128xf32>
    %23 = arith.addf %22, %21 : vector<8x128xf32>
    %24 = arith.divf %22, %23 : vector<8x128xf32>
    %25 = vector.extract_strided_slice %6 {offsets = [0, 256], sizes = [8, 128], strides = [1, 1]} : vector<8x384xf32> to vector<8x128xf32>
    %26 = vector.extract_strided_slice %8 {offsets = [0, 256], sizes = [8, 128], strides = [1, 1]} : vector<8x384xf32> to vector<8x128xf32>
    %c0_9 = arith.constant 0 : index
    %c0_10 = arith.constant 0 : index
    %27 = vector.load %arg4[%c0_9, %c0_10] : memref<1x128xf32, #tpu.memory_space<vmem>>, vector<1x128xf32>
    %28 = vector.broadcast %27 : vector<1x128xf32> to vector<8x128xf32>
    %29 = arith.addf %26, %28 : vector<8x128xf32>
    %30 = arith.mulf %16, %29 : vector<8x128xf32>
    %31 = arith.addf %25, %30 : vector<8x128xf32>
    %32 = math.tanh %31 : vector<8x128xf32>
    %cst_11 = arith.constant 1.000000e+00 : f32
    %33 = vector.broadcast %cst_11 : f32 to vector<8x128xf32>
    %34 = arith.subf %33, %24 : vector<8x128xf32>
    %35 = arith.mulf %34, %32 : vector<8x128xf32>
    %36 = arith.mulf %24, %3 : vector<8x128xf32>
    %37 = arith.addf %35, %36 : vector<8x128xf32>
    %38 = arith.index_cast %c0_i32_2 : i32 to index
    %c0_12 = arith.constant 0 : index
    %c0_13 = arith.constant 0 : index
    %39 = vector.load %arg5[%38, %c0_12, %c0_13] : memref<8x8x128xf32, #tpu.memory_space<vmem>>, vector<1x8x128xf32>
    %40 = vector.shape_cast %39 : vector<1x8x128xf32> to vector<8x128xf32>
    %41 = vector.shape_cast %37 : vector<8x128xf32> to vector<1x8x128xf32>
    tpu.vector_store %arg5[%38, %c0_12, %c0_13], %41 {strides = array<i32>} : memref<8x8x128xf32, #tpu.memory_space<vmem>>, vector<1x8x128xf32>,
    %c1_i32 = arith.constant 1 : i32
    %42 = arith.index_cast %c1_i32 : i32 to index
    %c0_14 = arith.constant 0 : index
    %c0_15 = arith.constant 0 : index
    %43 = vector.load %arg2[%42, %c0_14, %c0_15] : memref<8x8x384xf32, #tpu.memory_space<vmem>>, vector<1x8x384xf32>
    %44 = vector.shape_cast %43 : vector<1x8x384xf32> to vector<8x384xf32>
    %c0_16 = arith.constant 0 : index
    %c0_17 = arith.constant 0 : index
    %45 = vector.load %arg3[%c0_16, %c0_17] : memref<128x384xf32, #tpu.memory_space<vmem>>, vector<128x384xf32>
    %cst_18 = arith.constant dense<0.000000e+00> : vector<8x384xf32>
    %46 = tpu.matmul %37, %45, %cst_18 {dimension_numbers = #tpu.dot_dimension_numbers<[1], [0], [0], [1], [0, 0, 1, 1], [], []>} : vector<8x128xf32>, vector<128x384xf32>, vector<8x384xf32> -> vector<8x384xf32>
    %47 = vector.extract_strided_slice %44 {offsets = [0, 0], sizes = [8, 128], strides = [1, 1]} : vector<8x384xf32> to vector<8x128xf32>
    %48 = vector.extract_strided_slice %46 {offsets = [0, 0], sizes = [8, 128], strides = [1, 1]} : vector<8x384xf32> to vector<8x128xf32>
    %49 = arith.addf %47, %48 : vector<8x128xf32>
    %50 = arith.negf %49 : vector<8x128xf32>
    %51 = math.exp %50 : vector<8x128xf32>
    %cst_19 = arith.constant 1.000000e+00 : f32
    %52 = vector.broadcast %cst_19 : f32 to vector<8x128xf32>
    %53 = arith.addf %52, %51 : vector<8x128xf32>
    %54 = arith.divf %52, %53 : vector<8x128xf32>
    %55 = vector.extract_strided_slice %44 {offsets = [0, 128], sizes = [8, 128], strides = [1, 1]} : vector<8x384xf32> to vector<8x128xf32>
    %56 = vector.extract_strided_slice %46 {offsets = [0, 128], sizes = [8, 128], strides = [1, 1]} : vector<8x384xf32> to vector<8x128xf32>
    %57 = arith.addf %55, %56 : vector<8x128xf32>
    %58 = arith.negf %57 : vector<8x128xf32>
    %59 = math.exp %58 : vector<8x128xf32>
    %cst_20 = arith.constant 1.000000e+00 : f32
    %60 = vector.broadcast %cst_20 : f32 to vector<8x128xf32>
    %61 = arith.addf %60, %59 : vector<8x128xf32>
    %62 = arith.divf %60, %61 : vector<8x128xf32>
    %63 = vector.extract_strided_slice %44 {offsets = [0, 256], sizes = [8, 128], strides = [1, 1]} : vector<8x384xf32> to vector<8x128xf32>
    %64 = vector.extract_strided_slice %46 {offsets = [0, 256], sizes = [8, 128], strides = [1, 1]} : vector<8x384xf32> to vector<8x128xf32>
    %c0_21 = arith.constant 0 : index
    %c0_22 = arith.constant 0 : index
    %65 = vector.load %arg4[%c0_21, %c0_22] : memref<1x128xf32, #tpu.memory_space<vmem>>, vector<1x128xf32>
    %66 = vector.broadcast %65 : vector<1x128xf32> to vector<8x128xf32>
    %67 = arith.addf %64, %66 : vector<8x128xf32>
    %68 = arith.mulf %54, %67 : vector<8x128xf32>
    %69 = arith.addf %63, %68 : vector<8x128xf32>
    %70 = math.tanh %69 : vector<8x128xf32>
    %cst_23 = arith.constant 1.000000e+00 : f32
    %71 = vector.broadcast %cst_23 : f32 to vector<8x128xf32>
    %72 = arith.subf %71, %62 : vector<8x128xf32>
    %73 = arith.mulf %72, %70 : vector<8x128xf32>
    %74 = arith.mulf %62, %37 : vector<8x128xf32>
    %75 = arith.addf %73, %74 : vector<8x128xf32>
    %76 = arith.index_cast %c1_i32 : i32 to index
    %c0_24 = arith.constant 0 : index
    %c0_25 = arith.constant 0 : index
    %77 = vector.load %arg5[%76, %c0_24, %c0_25] : memref<8x8x128xf32, #tpu.memory_space<vmem>>, vector<1x8x128xf32>
    %78 = vector.shape_cast %77 : vector<1x8x128xf32> to vector<8x128xf32>
    %79 = vector.shape_cast %75 : vector<8x128xf32> to vector<1x8x128xf32>
    tpu.vector_store %arg5[%76, %c0_24, %c0_25], %79 {strides = array<i32>} : memref<8x8x128xf32, #tpu.memory_space<vmem>>, vector<1x8x128xf32>,
    %c2_i32 = arith.constant 2 : i32
    %80 = arith.index_cast %c2_i32 : i32 to index
    %c0_26 = arith.constant 0 : index
    %c0_27 = arith.constant 0 : index
    %81 = vector.load %arg2[%80, %c0_26, %c0_27] : memref<8x8x384xf32, #tpu.memory_space<vmem>>, vector<1x8x384xf32>
    %82 = vector.shape_cast %81 : vector<1x8x384xf32> to vector<8x384xf32>
    %c0_28 = arith.constant 0 : index
    %c0_29 = arith.constant 0 : index
    %83 = vector.load %arg3[%c0_28, %c0_29] : memref<128x384xf32, #tpu.memory_space<vmem>>, vector<128x384xf32>
    %cst_30 = arith.constant dense<0.000000e+00> : vector<8x384xf32>
    %84 = tpu.matmul %75, %83, %cst_30 {dimension_numbers = #tpu.dot_dimension_numbers<[1], [0], [0], [1], [0, 0, 1, 1], [], []>} : vector<8x128xf32>, vector<128x384xf32>, vector<8x384xf32> -> vector<8x384xf32>
    %85 = vector.extract_strided_slice %82 {offsets = [0, 0], sizes = [8, 128], strides = [1, 1]} : vector<8x384xf32> to vector<8x128xf32>
    %86 = vector.extract_strided_slice %84 {offsets = [0, 0], sizes = [8, 128], strides = [1, 1]} : vector<8x384xf32> to vector<8x128xf32>
    %87 = arith.addf %85, %86 : vector<8x128xf32>
    %88 = arith.negf %87 : vector<8x128xf32>
    %89 = math.exp %88 : vector<8x128xf32>
    %cst_31 = arith.constant 1.000000e+00 : f32
    %90 = vector.broadcast %cst_31 : f32 to vector<8x128xf32>
    %91 = arith.addf %90, %89 : vector<8x128xf32>
    %92 = arith.divf %90, %91 : vector<8x128xf32>
    %93 = vector.extract_strided_slice %82 {offsets = [0, 128], sizes = [8, 128], strides = [1, 1]} : vector<8x384xf32> to vector<8x128xf32>
    %94 = vector.extract_strided_slice %84 {offsets = [0, 128], sizes = [8, 128], strides = [1, 1]} : vector<8x384xf32> to vector<8x128xf32>
    %95 = arith.addf %93, %94 : vector<8x128xf32>
    %96 = arith.negf %95 : vector<8x128xf32>
    %97 = math.exp %96 : vector<8x128xf32>
    %cst_32 = arith.constant 1.000000e+00 : f32
    %98 = vector.broadcast %cst_32 : f32 to vector<8x128xf32>
    %99 = arith.addf %98, %97 : vector<8x128xf32>
    %100 = arith.divf %98, %99 : vector<8x128xf32>
    %101 = vector.extract_strided_slice %82 {offsets = [0, 256], sizes = [8, 128], strides = [1, 1]} : vector<8x384xf32> to vector<8x128xf32>
    %102 = vector.extract_strided_slice %84 {offsets = [0, 256], sizes = [8, 128], strides = [1, 1]} : vector<8x384xf32> to vector<8x128xf32>
    %c0_33 = arith.constant 0 : index
    %c0_34 = arith.constant 0 : index
    %103 = vector.load %arg4[%c0_33, %c0_34] : memref<1x128xf32, #tpu.memory_space<vmem>>, vector<1x128xf32>
    %104 = vector.broadcast %103 : vector<1x128xf32> to vector<8x128xf32>
    %105 = arith.addf %102, %104 : vector<8x128xf32>
    %106 = arith.mulf %92, %105 : vector<8x128xf32>
    %107 = arith.addf %101, %106 : vector<8x128xf32>
    %108 = math.tanh %107 : vector<8x128xf32>
    %cst_35 = arith.constant 1.000000e+00 : f32
    %109 = vector.broadcast %cst_35 : f32 to vector<8x128xf32>
    %110 = arith.subf %109, %100 : vector<8x128xf32>
    %111 = arith.mulf %110, %108 : vector<8x128xf32>
    %112 = arith.mulf %100, %75 : vector<8x128xf32>
    %113 = arith.addf %111, %112 : vector<8x128xf32>
    %114 = arith.index_cast %c2_i32 : i32 to index
    %c0_36 = arith.constant 0 : index
    %c0_37 = arith.constant 0 : index
    %115 = vector.load %arg5[%114, %c0_36, %c0_37] : memref<8x8x128xf32, #tpu.memory_space<vmem>>, vector<1x8x128xf32>
    %116 = vector.shape_cast %115 : vector<1x8x128xf32> to vector<8x128xf32>
    %117 = vector.shape_cast %113 : vector<8x128xf32> to vector<1x8x128xf32>
    tpu.vector_store %arg5[%114, %c0_36, %c0_37], %117 {strides = array<i32>} : memref<8x8x128xf32, #tpu.memory_space<vmem>>, vector<1x8x128xf32>,
    %c3_i32 = arith.constant 3 : i32
    %118 = arith.index_cast %c3_i32 : i32 to index
    %c0_38 = arith.constant 0 : index
    %c0_39 = arith.constant 0 : index
    %119 = vector.load %arg2[%118, %c0_38, %c0_39] : memref<8x8x384xf32, #tpu.memory_space<vmem>>, vector<1x8x384xf32>
    %120 = vector.shape_cast %119 : vector<1x8x384xf32> to vector<8x384xf32>
    %c0_40 = arith.constant 0 : index
    %c0_41 = arith.constant 0 : index
    %121 = vector.load %arg3[%c0_40, %c0_41] : memref<128x384xf32, #tpu.memory_space<vmem>>, vector<128x384xf32>
    %cst_42 = arith.constant dense<0.000000e+00> : vector<8x384xf32>
    %122 = tpu.matmul %113, %121, %cst_42 {dimension_numbers = #tpu.dot_dimension_numbers<[1], [0], [0], [1], [0, 0, 1, 1], [], []>} : vector<8x128xf32>, vector<128x384xf32>, vector<8x384xf32> -> vector<8x384xf32>
    %123 = vector.extract_strided_slice %120 {offsets = [0, 0], sizes = [8, 128], strides = [1, 1]} : vector<8x384xf32> to vector<8x128xf32>
    %124 = vector.extract_strided_slice %122 {offsets = [0, 0], sizes = [8, 128], strides = [1, 1]} : vector<8x384xf32> to vector<8x128xf32>
    %125 = arith.addf %123, %124 : vector<8x128xf32>
    %126 = arith.negf %125 : vector<8x128xf32>
    %127 = math.exp %126 : vector<8x128xf32>
    %cst_43 = arith.constant 1.000000e+00 : f32
    %128 = vector.broadcast %cst_43 : f32 to vector<8x128xf32>
    %129 = arith.addf %128, %127 : vector<8x128xf32>
    %130 = arith.divf %128, %129 : vector<8x128xf32>
    %131 = vector.extract_strided_slice %120 {offsets = [0, 128], sizes = [8, 128], strides = [1, 1]} : vector<8x384xf32> to vector<8x128xf32>
    %132 = vector.extract_strided_slice %122 {offsets = [0, 128], sizes = [8, 128], strides = [1, 1]} : vector<8x384xf32> to vector<8x128xf32>
    %133 = arith.addf %131, %132 : vector<8x128xf32>
    %134 = arith.negf %133 : vector<8x128xf32>
    %135 = math.exp %134 : vector<8x128xf32>
    %cst_44 = arith.constant 1.000000e+00 : f32
    %136 = vector.broadcast %cst_44 : f32 to vector<8x128xf32>
    %137 = arith.addf %136, %135 : vector<8x128xf32>
    %138 = arith.divf %136, %137 : vector<8x128xf32>
    %139 = vector.extract_strided_slice %120 {offsets = [0, 256], sizes = [8, 128], strides = [1, 1]} : vector<8x384xf32> to vector<8x128xf32>
    %140 = vector.extract_strided_slice %122 {offsets = [0, 256], sizes = [8, 128], strides = [1, 1]} : vector<8x384xf32> to vector<8x128xf32>
    %c0_45 = arith.constant 0 : index
    %c0_46 = arith.constant 0 : index
    %141 = vector.load %arg4[%c0_45, %c0_46] : memref<1x128xf32, #tpu.memory_space<vmem>>, vector<1x128xf32>
    %142 = vector.broadcast %141 : vector<1x128xf32> to vector<8x128xf32>
    %143 = arith.addf %140, %142 : vector<8x128xf32>
    %144 = arith.mulf %130, %143 : vector<8x128xf32>
    %145 = arith.addf %139, %144 : vector<8x128xf32>
    %146 = math.tanh %145 : vector<8x128xf32>
    %cst_47 = arith.constant 1.000000e+00 : f32
    %147 = vector.broadcast %cst_47 : f32 to vector<8x128xf32>
    %148 = arith.subf %147, %138 : vector<8x128xf32>
    %149 = arith.mulf %148, %146 : vector<8x128xf32>
    %150 = arith.mulf %138, %113 : vector<8x128xf32>
    %151 = arith.addf %149, %150 : vector<8x128xf32>
    %152 = arith.index_cast %c3_i32 : i32 to index
    %c0_48 = arith.constant 0 : index
    %c0_49 = arith.constant 0 : index
    %153 = vector.load %arg5[%152, %c0_48, %c0_49] : memref<8x8x128xf32, #tpu.memory_space<vmem>>, vector<1x8x128xf32>
    %154 = vector.shape_cast %153 : vector<1x8x128xf32> to vector<8x128xf32>
    %155 = vector.shape_cast %151 : vector<8x128xf32> to vector<1x8x128xf32>
    tpu.vector_store %arg5[%152, %c0_48, %c0_49], %155 {strides = array<i32>} : memref<8x8x128xf32, #tpu.memory_space<vmem>>, vector<1x8x128xf32>,
    %c4_i32 = arith.constant 4 : i32
    %156 = arith.index_cast %c4_i32 : i32 to index
    %c0_50 = arith.constant 0 : index
    %c0_51 = arith.constant 0 : index
    %157 = vector.load %arg2[%156, %c0_50, %c0_51] : memref<8x8x384xf32, #tpu.memory_space<vmem>>, vector<1x8x384xf32>
    %158 = vector.shape_cast %157 : vector<1x8x384xf32> to vector<8x384xf32>
    %c0_52 = arith.constant 0 : index
    %c0_53 = arith.constant 0 : index
    %159 = vector.load %arg3[%c0_52, %c0_53] : memref<128x384xf32, #tpu.memory_space<vmem>>, vector<128x384xf32>
    %cst_54 = arith.constant dense<0.000000e+00> : vector<8x384xf32>
    %160 = tpu.matmul %151, %159, %cst_54 {dimension_numbers = #tpu.dot_dimension_numbers<[1], [0], [0], [1], [0, 0, 1, 1], [], []>} : vector<8x128xf32>, vector<128x384xf32>, vector<8x384xf32> -> vector<8x384xf32>
    %161 = vector.extract_strided_slice %158 {offsets = [0, 0], sizes = [8, 128], strides = [1, 1]} : vector<8x384xf32> to vector<8x128xf32>
    %162 = vector.extract_strided_slice %160 {offsets = [0, 0], sizes = [8, 128], strides = [1, 1]} : vector<8x384xf32> to vector<8x128xf32>
    %163 = arith.addf %161, %162 : vector<8x128xf32>
    %164 = arith.negf %163 : vector<8x128xf32>
    %165 = math.exp %164 : vector<8x128xf32>
    %cst_55 = arith.constant 1.000000e+00 : f32
    %166 = vector.broadcast %cst_55 : f32 to vector<8x128xf32>
    %167 = arith.addf %166, %165 : vector<8x128xf32>
    %168 = arith.divf %166, %167 : vector<8x128xf32>
    %169 = vector.extract_strided_slice %158 {offsets = [0, 128], sizes = [8, 128], strides = [1, 1]} : vector<8x384xf32> to vector<8x128xf32>
    %170 = vector.extract_strided_slice %160 {offsets = [0, 128], sizes = [8, 128], strides = [1, 1]} : vector<8x384xf32> to vector<8x128xf32>
    %171 = arith.addf %169, %170 : vector<8x128xf32>
    %172 = arith.negf %171 : vector<8x128xf32>
    %173 = math.exp %172 : vector<8x128xf32>
    %cst_56 = arith.constant 1.000000e+00 : f32
    %174 = vector.broadcast %cst_56 : f32 to vector<8x128xf32>
    %175 = arith.addf %174, %173 : vector<8x128xf32>
    %176 = arith.divf %174, %175 : vector<8x128xf32>
    %177 = vector.extract_strided_slice %158 {offsets = [0, 256], sizes = [8, 128], strides = [1, 1]} : vector<8x384xf32> to vector<8x128xf32>
    %178 = vector.extract_strided_slice %160 {offsets = [0, 256], sizes = [8, 128], strides = [1, 1]} : vector<8x384xf32> to vector<8x128xf32>
    %c0_57 = arith.constant 0 : index
    %c0_58 = arith.constant 0 : index
    %179 = vector.load %arg4[%c0_57, %c0_58] : memref<1x128xf32, #tpu.memory_space<vmem>>, vector<1x128xf32>
    %180 = vector.broadcast %179 : vector<1x128xf32> to vector<8x128xf32>
    %181 = arith.addf %178, %180 : vector<8x128xf32>
    %182 = arith.mulf %168, %181 : vector<8x128xf32>
    %183 = arith.addf %177, %182 : vector<8x128xf32>
    %184 = math.tanh %183 : vector<8x128xf32>
    %cst_59 = arith.constant 1.000000e+00 : f32
    %185 = vector.broadcast %cst_59 : f32 to vector<8x128xf32>
    %186 = arith.subf %185, %176 : vector<8x128xf32>
    %187 = arith.mulf %186, %184 : vector<8x128xf32>
    %188 = arith.mulf %176, %151 : vector<8x128xf32>
    %189 = arith.addf %187, %188 : vector<8x128xf32>
    %190 = arith.index_cast %c4_i32 : i32 to index
    %c0_60 = arith.constant 0 : index
    %c0_61 = arith.constant 0 : index
    %191 = vector.load %arg5[%190, %c0_60, %c0_61] : memref<8x8x128xf32, #tpu.memory_space<vmem>>, vector<1x8x128xf32>
    %192 = vector.shape_cast %191 : vector<1x8x128xf32> to vector<8x128xf32>
    %193 = vector.shape_cast %189 : vector<8x128xf32> to vector<1x8x128xf32>
    tpu.vector_store %arg5[%190, %c0_60, %c0_61], %193 {strides = array<i32>} : memref<8x8x128xf32, #tpu.memory_space<vmem>>, vector<1x8x128xf32>,
    %c5_i32 = arith.constant 5 : i32
    %194 = arith.index_cast %c5_i32 : i32 to index
    %c0_62 = arith.constant 0 : index
    %c0_63 = arith.constant 0 : index
    %195 = vector.load %arg2[%194, %c0_62, %c0_63] : memref<8x8x384xf32, #tpu.memory_space<vmem>>, vector<1x8x384xf32>
    %196 = vector.shape_cast %195 : vector<1x8x384xf32> to vector<8x384xf32>
    %c0_64 = arith.constant 0 : index
    %c0_65 = arith.constant 0 : index
    %197 = vector.load %arg3[%c0_64, %c0_65] : memref<128x384xf32, #tpu.memory_space<vmem>>, vector<128x384xf32>
    %cst_66 = arith.constant dense<0.000000e+00> : vector<8x384xf32>
    %198 = tpu.matmul %189, %197, %cst_66 {dimension_numbers = #tpu.dot_dimension_numbers<[1], [0], [0], [1], [0, 0, 1, 1], [], []>} : vector<8x128xf32>, vector<128x384xf32>, vector<8x384xf32> -> vector<8x384xf32>
    %199 = vector.extract_strided_slice %196 {offsets = [0, 0], sizes = [8, 128], strides = [1, 1]} : vector<8x384xf32> to vector<8x128xf32>
    %200 = vector.extract_strided_slice %198 {offsets = [0, 0], sizes = [8, 128], strides = [1, 1]} : vector<8x384xf32> to vector<8x128xf32>
    %201 = arith.addf %199, %200 : vector<8x128xf32>
    %202 = arith.negf %201 : vector<8x128xf32>
    %203 = math.exp %202 : vector<8x128xf32>
    %cst_67 = arith.constant 1.000000e+00 : f32
    %204 = vector.broadcast %cst_67 : f32 to vector<8x128xf32>
    %205 = arith.addf %204, %203 : vector<8x128xf32>
    %206 = arith.divf %204, %205 : vector<8x128xf32>
    %207 = vector.extract_strided_slice %196 {offsets = [0, 128], sizes = [8, 128], strides = [1, 1]} : vector<8x384xf32> to vector<8x128xf32>
    %208 = vector.extract_strided_slice %198 {offsets = [0, 128], sizes = [8, 128], strides = [1, 1]} : vector<8x384xf32> to vector<8x128xf32>
    %209 = arith.addf %207, %208 : vector<8x128xf32>
    %210 = arith.negf %209 : vector<8x128xf32>
    %211 = math.exp %210 : vector<8x128xf32>
    %cst_68 = arith.constant 1.000000e+00 : f32
    %212 = vector.broadcast %cst_68 : f32 to vector<8x128xf32>
    %213 = arith.addf %212, %211 : vector<8x128xf32>
    %214 = arith.divf %212, %213 : vector<8x128xf32>
    %215 = vector.extract_strided_slice %196 {offsets = [0, 256], sizes = [8, 128], strides = [1, 1]} : vector<8x384xf32> to vector<8x128xf32>
    %216 = vector.extract_strided_slice %198 {offsets = [0, 256], sizes = [8, 128], strides = [1, 1]} : vector<8x384xf32> to vector<8x128xf32>
    %c0_69 = arith.constant 0 : index
    %c0_70 = arith.constant 0 : index
    %217 = vector.load %arg4[%c0_69, %c0_70] : memref<1x128xf32, #tpu.memory_space<vmem>>, vector<1x128xf32>
    %218 = vector.broadcast %217 : vector<1x128xf32> to vector<8x128xf32>
    %219 = arith.addf %216, %218 : vector<8x128xf32>
    %220 = arith.mulf %206, %219 : vector<8x128xf32>
    %221 = arith.addf %215, %220 : vector<8x128xf32>
    %222 = math.tanh %221 : vector<8x128xf32>
    %cst_71 = arith.constant 1.000000e+00 : f32
    %223 = vector.broadcast %cst_71 : f32 to vector<8x128xf32>
    %224 = arith.subf %223, %214 : vector<8x128xf32>
    %225 = arith.mulf %224, %222 : vector<8x128xf32>
    %226 = arith.mulf %214, %189 : vector<8x128xf32>
    %227 = arith.addf %225, %226 : vector<8x128xf32>
    %228 = arith.index_cast %c5_i32 : i32 to index
    %c0_72 = arith.constant 0 : index
    %c0_73 = arith.constant 0 : index
    %229 = vector.load %arg5[%228, %c0_72, %c0_73] : memref<8x8x128xf32, #tpu.memory_space<vmem>>, vector<1x8x128xf32>
    %230 = vector.shape_cast %229 : vector<1x8x128xf32> to vector<8x128xf32>
    %231 = vector.shape_cast %227 : vector<8x128xf32> to vector<1x8x128xf32>
    tpu.vector_store %arg5[%228, %c0_72, %c0_73], %231 {strides = array<i32>} : memref<8x8x128xf32, #tpu.memory_space<vmem>>, vector<1x8x128xf32>,
    %c6_i32 = arith.constant 6 : i32
    %232 = arith.index_cast %c6_i32 : i32 to index
    %c0_74 = arith.constant 0 : index
    %c0_75 = arith.constant 0 : index
    %233 = vector.load %arg2[%232, %c0_74, %c0_75] : memref<8x8x384xf32, #tpu.memory_space<vmem>>, vector<1x8x384xf32>
    %234 = vector.shape_cast %233 : vector<1x8x384xf32> to vector<8x384xf32>
    %c0_76 = arith.constant 0 : index
    %c0_77 = arith.constant 0 : index
    %235 = vector.load %arg3[%c0_76, %c0_77] : memref<128x384xf32, #tpu.memory_space<vmem>>, vector<128x384xf32>
    %cst_78 = arith.constant dense<0.000000e+00> : vector<8x384xf32>
    %236 = tpu.matmul %227, %235, %cst_78 {dimension_numbers = #tpu.dot_dimension_numbers<[1], [0], [0], [1], [0, 0, 1, 1], [], []>} : vector<8x128xf32>, vector<128x384xf32>, vector<8x384xf32> -> vector<8x384xf32>
    %237 = vector.extract_strided_slice %234 {offsets = [0, 0], sizes = [8, 128], strides = [1, 1]} : vector<8x384xf32> to vector<8x128xf32>
    %238 = vector.extract_strided_slice %236 {offsets = [0, 0], sizes = [8, 128], strides = [1, 1]} : vector<8x384xf32> to vector<8x128xf32>
    %239 = arith.addf %237, %238 : vector<8x128xf32>
    %240 = arith.negf %239 : vector<8x128xf32>
    %241 = math.exp %240 : vector<8x128xf32>
    %cst_79 = arith.constant 1.000000e+00 : f32
    %242 = vector.broadcast %cst_79 : f32 to vector<8x128xf32>
    %243 = arith.addf %242, %241 : vector<8x128xf32>
    %244 = arith.divf %242, %243 : vector<8x128xf32>
    %245 = vector.extract_strided_slice %234 {offsets = [0, 128], sizes = [8, 128], strides = [1, 1]} : vector<8x384xf32> to vector<8x128xf32>
    %246 = vector.extract_strided_slice %236 {offsets = [0, 128], sizes = [8, 128], strides = [1, 1]} : vector<8x384xf32> to vector<8x128xf32>
    %247 = arith.addf %245, %246 : vector<8x128xf32>
    %248 = arith.negf %247 : vector<8x128xf32>
    %249 = math.exp %248 : vector<8x128xf32>
    %cst_80 = arith.constant 1.000000e+00 : f32
    %250 = vector.broadcast %cst_80 : f32 to vector<8x128xf32>
    %251 = arith.addf %250, %249 : vector<8x128xf32>
    %252 = arith.divf %250, %251 : vector<8x128xf32>
    %253 = vector.extract_strided_slice %234 {offsets = [0, 256], sizes = [8, 128], strides = [1, 1]} : vector<8x384xf32> to vector<8x128xf32>
    %254 = vector.extract_strided_slice %236 {offsets = [0, 256], sizes = [8, 128], strides = [1, 1]} : vector<8x384xf32> to vector<8x128xf32>
    %c0_81 = arith.constant 0 : index
    %c0_82 = arith.constant 0 : index
    %255 = vector.load %arg4[%c0_81, %c0_82] : memref<1x128xf32, #tpu.memory_space<vmem>>, vector<1x128xf32>
    %256 = vector.broadcast %255 : vector<1x128xf32> to vector<8x128xf32>
    %257 = arith.addf %254, %256 : vector<8x128xf32>
    %258 = arith.mulf %244, %257 : vector<8x128xf32>
    %259 = arith.addf %253, %258 : vector<8x128xf32>
    %260 = math.tanh %259 : vector<8x128xf32>
    %cst_83 = arith.constant 1.000000e+00 : f32
    %261 = vector.broadcast %cst_83 : f32 to vector<8x128xf32>
    %262 = arith.subf %261, %252 : vector<8x128xf32>
    %263 = arith.mulf %262, %260 : vector<8x128xf32>
    %264 = arith.mulf %252, %227 : vector<8x128xf32>
    %265 = arith.addf %263, %264 : vector<8x128xf32>
    %266 = arith.index_cast %c6_i32 : i32 to index
    %c0_84 = arith.constant 0 : index
    %c0_85 = arith.constant 0 : index
    %267 = vector.load %arg5[%266, %c0_84, %c0_85] : memref<8x8x128xf32, #tpu.memory_space<vmem>>, vector<1x8x128xf32>
    %268 = vector.shape_cast %267 : vector<1x8x128xf32> to vector<8x128xf32>
    %269 = vector.shape_cast %265 : vector<8x128xf32> to vector<1x8x128xf32>
    tpu.vector_store %arg5[%266, %c0_84, %c0_85], %269 {strides = array<i32>} : memref<8x8x128xf32, #tpu.memory_space<vmem>>, vector<1x8x128xf32>,
    %c7_i32 = arith.constant 7 : i32
    %270 = arith.index_cast %c7_i32 : i32 to index
    %c0_86 = arith.constant 0 : index
    %c0_87 = arith.constant 0 : index
    %271 = vector.load %arg2[%270, %c0_86, %c0_87] : memref<8x8x384xf32, #tpu.memory_space<vmem>>, vector<1x8x384xf32>
    %272 = vector.shape_cast %271 : vector<1x8x384xf32> to vector<8x384xf32>
    %c0_88 = arith.constant 0 : index
    %c0_89 = arith.constant 0 : index
    %273 = vector.load %arg3[%c0_88, %c0_89] : memref<128x384xf32, #tpu.memory_space<vmem>>, vector<128x384xf32>
    %cst_90 = arith.constant dense<0.000000e+00> : vector<8x384xf32>
    %274 = tpu.matmul %265, %273, %cst_90 {dimension_numbers = #tpu.dot_dimension_numbers<[1], [0], [0], [1], [0, 0, 1, 1], [], []>} : vector<8x128xf32>, vector<128x384xf32>, vector<8x384xf32> -> vector<8x384xf32>
    %275 = vector.extract_strided_slice %272 {offsets = [0, 0], sizes = [8, 128], strides = [1, 1]} : vector<8x384xf32> to vector<8x128xf32>
    %276 = vector.extract_strided_slice %274 {offsets = [0, 0], sizes = [8, 128], strides = [1, 1]} : vector<8x384xf32> to vector<8x128xf32>
    %277 = arith.addf %275, %276 : vector<8x128xf32>
    %278 = arith.negf %277 : vector<8x128xf32>
    %279 = math.exp %278 : vector<8x128xf32>
    %cst_91 = arith.constant 1.000000e+00 : f32
    %280 = vector.broadcast %cst_91 : f32 to vector<8x128xf32>
    %281 = arith.addf %280, %279 : vector<8x128xf32>
    %282 = arith.divf %280, %281 : vector<8x128xf32>
    %283 = vector.extract_strided_slice %272 {offsets = [0, 128], sizes = [8, 128], strides = [1, 1]} : vector<8x384xf32> to vector<8x128xf32>
    %284 = vector.extract_strided_slice %274 {offsets = [0, 128], sizes = [8, 128], strides = [1, 1]} : vector<8x384xf32> to vector<8x128xf32>
    %285 = arith.addf %283, %284 : vector<8x128xf32>
    %286 = arith.negf %285 : vector<8x128xf32>
    %287 = math.exp %286 : vector<8x128xf32>
    %cst_92 = arith.constant 1.000000e+00 : f32
    %288 = vector.broadcast %cst_92 : f32 to vector<8x128xf32>
    %289 = arith.addf %288, %287 : vector<8x128xf32>
    %290 = arith.divf %288, %289 : vector<8x128xf32>
    %291 = vector.extract_strided_slice %272 {offsets = [0, 256], sizes = [8, 128], strides = [1, 1]} : vector<8x384xf32> to vector<8x128xf32>
    %292 = vector.extract_strided_slice %274 {offsets = [0, 256], sizes = [8, 128], strides = [1, 1]} : vector<8x384xf32> to vector<8x128xf32>
    %c0_93 = arith.constant 0 : index
    %c0_94 = arith.constant 0 : index
    %293 = vector.load %arg4[%c0_93, %c0_94] : memref<1x128xf32, #tpu.memory_space<vmem>>, vector<1x128xf32>
    %294 = vector.broadcast %293 : vector<1x128xf32> to vector<8x128xf32>
    %295 = arith.addf %292, %294 : vector<8x128xf32>
    %296 = arith.mulf %282, %295 : vector<8x128xf32>
    %297 = arith.addf %291, %296 : vector<8x128xf32>
    %298 = math.tanh %297 : vector<8x128xf32>
    %cst_95 = arith.constant 1.000000e+00 : f32
    %299 = vector.broadcast %cst_95 : f32 to vector<8x128xf32>
    %300 = arith.subf %299, %290 : vector<8x128xf32>
    %301 = arith.mulf %300, %298 : vector<8x128xf32>
    %302 = arith.mulf %290, %265 : vector<8x128xf32>
    %303 = arith.addf %301, %302 : vector<8x128xf32>
    %304 = arith.index_cast %c7_i32 : i32 to index
    %c0_96 = arith.constant 0 : index
    %c0_97 = arith.constant 0 : index
    %305 = vector.load %arg5[%304, %c0_96, %c0_97] : memref<8x8x128xf32, #tpu.memory_space<vmem>>, vector<1x8x128xf32>
    %306 = vector.shape_cast %305 : vector<1x8x128xf32> to vector<8x128xf32>
    %307 = vector.shape_cast %303 : vector<8x128xf32> to vector<1x8x128xf32>
    tpu.vector_store %arg5[%304, %c0_96, %c0_97], %307 {strides = array<i32>} : memref<8x8x128xf32, #tpu.memory_space<vmem>>, vector<1x8x128xf32>,
    %c8_i32 = arith.constant 8 : i32
    %c0_98 = arith.constant 0 : index
    %c0_99 = arith.constant 0 : index
    %308 = vector.load %arg6[%c0_98, %c0_99] : memref<8x128xf32, #tpu.memory_space<vmem>>, vector<8x128xf32>
    tpu.vector_store %arg6[%c0_98, %c0_99], %303 {strides = array<i32>} : memref<8x128xf32, #tpu.memory_space<vmem>>, vector<8x128xf32>,
    return
  }
  func.func @transform_0(%arg0: i32, %arg1: i32) -> (i32, i32, i32) {
    %c0_i32 = arith.constant 0 : i32
    %c0_i32_0 = arith.constant 0 : i32
    return %arg1, %arg0, %c0_i32 : i32, i32, i32
  }
  func.func @transform_1(%arg0: i32, %arg1: i32) -> (i32, i32) {
    %c0_i32 = arith.constant 0 : i32
    %c0_i32_0 = arith.constant 0 : i32
    %c0_i32_1 = arith.constant 0 : i32
    return %c0_i32, %c0_i32_0 : i32, i32
  }
  func.func @transform_2(%arg0: i32, %arg1: i32) -> (i32, i32) {
    %c0_i32 = arith.constant 0 : i32
    %c0_i32_0 = arith.constant 0 : i32
    %c0_i32_1 = arith.constant 0 : i32
    return %c0_i32, %c0_i32_0 : i32, i32
  }
  func.func @transform_3(%arg0: i32, %arg1: i32) -> (i32, i32, i32) {
    %c0_i32 = arith.constant 0 : i32
    %c0_i32_0 = arith.constant 0 : i32
    return %arg1, %arg0, %c0_i32 : i32, i32, i32
  }
}

</mosaic_0001>

<llo_original>
// kernel: tpu_custom_call.1
$region0: #{tpu_custom_call.1}
  #allocation0 [shape = 'u32[]', space=smem, size = 0x4, offset = 0x4, fixed_abs, tag = 'smem constant byte address 0x4 - core index']
  #allocation1 [shape = 'u32[144,128]{1,0:T(1,128)}', space=vmem, size = 0x12000, scoped, tag = 'internal scratch']
  #allocation2 [shape = 'f32[8,128]{1,0:T(8,128)}', space=vmem, size = 0x1000, scoped, tag = 'scratch operand']
  %s0 = inlined_call_operand.hbm [shape: f32[8,8,384], index: 0, kind: input, shape index: {}]
  %s1 = inlined_call_operand.hbm [shape: f32[128,384], index: 1, kind: input, shape index: {}]
  %s2 = inlined_call_operand.vmem [shape: f32[1,128], index: 2, kind: input, shape index: {}]
  %s3 = inlined_call_operand.hbm [shape: f32[8,8,128], index: 3, kind: output, shape index: {}]
  %s4 = sld [smem:[#allocation0]]
  $region34: #{tpu_custom_call.1} parent=0
    _
  %s6 = ssub.s32 1, %s4
  %s7 = scalar_select 0, %s6, %s4
  $region1: #{tpu_custom_call.1} parent=0
    #allocation3 [shape = 'u8[98304]{0}', space=vmem, size = 0x18000, scoped, tag = 'input window, operand 0, single buffered']
    #allocation4 [shape = 's32[1]{0}', space=sflag, size = 0x4, scoped, tag = 'scoped memory for tpu_custom_call.1']
    #allocation5 [shape = 's32[1]{0}', space=sflag, size = 0x4, scoped, tag = 'scoped memory for tpu_custom_call.1']
    #allocation6 [shape = 'u8[196608]{0}', space=vmem, size = 0x30000, scoped, tag = 'input window, operand 1, single buffered']
    #allocation7 [shape = 's32[1]{0}', space=sflag, size = 0x4, scoped, tag = 'scoped memory for tpu_custom_call.1']
    #allocation8 [shape = 'u8[32768]{0}', space=vmem, size = 0x8000, scoped, tag = 'output window, operand 0, single buffered']
    %8 = vsyncpa [#allocation4], 0
    %9 = vsyncpa [#allocation7], 0
    %10 = vsyncpa [#allocation5], 0
    // Predicated region
    $region2: #{tpu_custom_call.1} parent=1 // pred_check
      _
    $region3: #{tpu_custom_call.1} parent=1 // pred_check_branch
      %12 = sbr.rel (0) target = $region5
    $region4: #{tpu_custom_call.1} parent=1 // pred_region
      %s14 = ssub.s32 3072, 3072
      %15 = vsyncadd [#allocation4], %s14
      %s16 = sshll.u32 [#allocation3], 4
      %s17 = int_to_ptr.vmem [resolvable:$true] %s16
      %22 = dma.hbm_to_vmem [thread:$0]  %s0, 3072, %s17, [#allocation4], 384, 384, 24
    $region5: #{tpu_custom_call.1} parent=1 // pred_fallthru
      _
    // Predicated region
    $region6: #{tpu_custom_call.1} parent=1 // pred_check
      _
    $region7: #{tpu_custom_call.1} parent=1 // pred_check_branch
      %24 = sbr.rel (0) target = $region9
    $region8: #{tpu_custom_call.1} parent=1 // pred_region
      %s26 = ssub.s32 6144, 6144
      %27 = vsyncadd [#allocation7], %s26
      %s28 = sshll.u32 [#allocation6], 4
      %s29 = int_to_ptr.vmem [resolvable:$true] %s28
      %34 = dma.hbm_to_vmem [thread:$0]  %s1, 6144, %s29, [#allocation7], 384, 384, 24
    $region9: #{tpu_custom_call.1} parent=1 // pred_fallthru
      _
    // Predicated region
    $region10: #{tpu_custom_call.1} parent=1 // pred_check
      _
    $region11: #{tpu_custom_call.1} parent=1 // pred_check_branch
      %36 = sbr.rel (0) target = $region13
    $region12: #{tpu_custom_call.1} parent=1 // pred_region
      _
    $region13: #{tpu_custom_call.1} parent=1 // pred_fallthru
      _
    // Predicated region
    $region14: #{tpu_custom_call.1} parent=1 // pred_check
      _
    $region15: #{tpu_custom_call.1} parent=1 // pred_check_branch
      %38 = sbr.rel (0) target = $region17
    $region16: #{tpu_custom_call.1} parent=1 // pred_region
      %39 = dma.done [#allocation4], 3072
    $region17: #{tpu_custom_call.1} parent=1 // pred_fallthru
      _
    // Predicated region
    $region18: #{tpu_custom_call.1} parent=1 // pred_check
      _
    $region19: #{tpu_custom_call.1} parent=1 // pred_check_branch
      %41 = sbr.rel (0) target = $region21
    $region20: #{tpu_custom_call.1} parent=1 // pred_region
      %42 = dma.done [#allocation7], 6144
    $region21: #{tpu_custom_call.1} parent=1 // pred_fallthru
      _
    %p43 = scmp.eq.s32.totalorder 0, 0
    // Predicated region
    $region22: #{tpu_custom_call.1} parent=1 // pred_check
      %p44 = pneg %p43
    $region23: #{tpu_custom_call.1} parent=1 // pred_check_branch
      %46 = sbr.rel (%p44) target = $region25
    $region24: #{tpu_custom_call.1} parent=1 // pred_region
      %47 = vst [vmem:[#allocation2] sm:$0xff] 0.0
    $region25: #{tpu_custom_call.1} parent=1 // pred_fallthru
      _
    %v48 = vld [vmem:[#allocation2] sm:$0xff]
    %v49 = vld [vmem:[#allocation3] sm:$0xff]
    %v50 = vld [vmem:[#allocation3 + $0x8] sm:$0xff]
    %v51 = vld [vmem:[#allocation3 + $0x10] sm:$0xff]
    %v52 = vld [vmem:[#allocation6] sm:$0xff]
    %v53 = vld [vmem:[#allocation6 + $0x8] sm:$0xff]
    %v54 = vld [vmem:[#allocation6 + $0x10] sm:$0xff]
    %v55 = vld [vmem:[#allocation6 + $0x18] sm:$0xff]
    %v56 = vld [vmem:[#allocation6 + $0x20] sm:$0xff]
    %v57 = vld [vmem:[#allocation6 + $0x28] sm:$0xff]
    %v58 = vld [vmem:[#allocation6 + $0x30] sm:$0xff]
    %v59 = vld [vmem:[#allocation6 + $0x38] sm:$0xff]
    %v60 = vld [vmem:[#allocation6 + $0x40] sm:$0xff]
    %v61 = vld [vmem:[#allocation6 + $0x48] sm:$0xff]
    %v62 = vld [vmem:[#allocation6 + $0x50] sm:$0xff]
    %v63 = vld [vmem:[#allocation6 + $0x58] sm:$0xff]
    %v64 = vld [vmem:[#allocation6 + $0x60] sm:$0xff]
    %v65 = vld [vmem:[#allocation6 + $0x68] sm:$0xff]
    %v66 = vld [vmem:[#allocation6 + $0x70] sm:$0xff]
    %v67 = vld [vmem:[#allocation6 + $0x78] sm:$0xff]
    %v68 = vld [vmem:[#allocation6 + $0x80] sm:$0xff]
    %v69 = vld [vmem:[#allocation6 + $0x88] sm:$0xff]
    %v70 = vld [vmem:[#allocation6 + $0x90] sm:$0xff]
    %v71 = vld [vmem:[#allocation6 + $0x98] sm:$0xff]
    %v72 = vld [vmem:[#allocation6 + $0xa0] sm:$0xff]
    %v73 = vld [vmem:[#allocation6 + $0xa8] sm:$0xff]
    %v74 = vld [vmem:[#allocation6 + $0xb0] sm:$0xff]
    %v75 = vld [vmem:[#allocation6 + $0xb8] sm:$0xff]
    %v76 = vld [vmem:[#allocation6 + $0xc0] sm:$0xff]
    %v77 = vld [vmem:[#allocation6 + $0xc8] sm:$0xff]
    %v78 = vld [vmem:[#allocation6 + $0xd0] sm:$0xff]
    %v79 = vld [vmem:[#allocation6 + $0xd8] sm:$0xff]
    %v80 = vld [vmem:[#allocation6 + $0xe0] sm:$0xff]
    %v81 = vld [vmem:[#allocation6 + $0xe8] sm:$0xff]
    %v82 = vld [vmem:[#allocation6 + $0xf0] sm:$0xff]
    %v83 = vld [vmem:[#allocation6 + $0xf8] sm:$0xff]
    %v84 = vld [vmem:[#allocation6 + $0x100] sm:$0xff]
    %v85 = vld [vmem:[#allocation6 + $0x108] sm:$0xff]
    %v86 = vld [vmem:[#allocation6 + $0x110] sm:$0xff]
    %v87 = vld [vmem:[#allocation6 + $0x118] sm:$0xff]
    %v88 = vld [vmem:[#allocation6 + $0x120] sm:$0xff]
    %v89 = vld [vmem:[#allocation6 + $0x128] sm:$0xff]
    %v90 = vld [vmem:[#allocation6 + $0x130] sm:$0xff]
    %v91 = vld [vmem:[#allocation6 + $0x138] sm:$0xff]
    %v92 = vld [vmem:[#allocation6 + $0x140] sm:$0xff]
    %v93 = vld [vmem:[#allocation6 + $0x148] sm:$0xff]
    %v94 = vld [vmem:[#allocation6 + $0x150] sm:$0xff]
    %v95 = vld [vmem:[#allocation6 + $0x158] sm:$0xff]
    %v96 = vld [vmem:[#allocation6 + $0x160] sm:$0xff]
    %v97 = vld [vmem:[#allocation6 + $0x168] sm:$0xff]
    %v98 = vld [vmem:[#allocation6 + $0x170] sm:$0xff]
    %v99 = vld [vmem:[#allocation6 + $0x178] sm:$0xff]
    %100 = vmatprep.subr.mxu0 %v53
    %101 = vmatpush1.msra.mxu0 %v52
    %102 = vmatprep.subr.mxu0 %v56
    %103 = vmatpush1.msra.mxu0 %v55
    %104 = vmatprep.subr.mxu0 %v59
    %105 = vmatpush1.msra.mxu0 %v58
    %106 = vmatprep.subr.mxu0 %v62
    %107 = vmatpush1.msra.mxu0 %v61
    %108 = vmatprep.subr.mxu0 %v65
    %109 = vmatpush1.msra.mxu0 %v64
    %110 = vmatprep.subr.mxu0 %v68
    %111 = vmatpush1.msra.mxu0 %v67
    %112 = vmatprep.subr.mxu0 %v71
    %113 = vmatpush1.msra.mxu0 %v70
    %114 = vmatprep.subr.mxu0 %v74
    %115 = vmatpush1.msra.mxu0 %v73
    %116 = vmatprep.subr.mxu0 %v77
    %117 = vmatpush1.msra.mxu0 %v76
    %118 = vmatprep.subr.mxu0 %v80
    %119 = vmatpush1.msra.mxu0 %v79
    %120 = vmatprep.subr.mxu0 %v83
    %121 = vmatpush1.msra.mxu0 %v82
    %122 = vmatprep.subr.mxu0 %v86
    %123 = vmatpush1.msra.mxu0 %v85
    %124 = vmatprep.subr.mxu0 %v89
    %125 = vmatpush1.msra.mxu0 %v88
    %126 = vmatprep.subr.mxu0 %v92
    %127 = vmatpush1.msra.mxu0 %v91
    %128 = vmatprep.subr.mxu0 %v95
    %129 = vmatpush1.msra.mxu0 %v94
    %130 = vmatprep.subr.mxu0 %v98
    %131 = vmatpush1.msra.mxu0 %v97
    %132 = vmatprep.subr.mxu0 0.0
    %133 = vmatpush1.msra.mxu0 0.0
    %134 = vmatprep.subr.mxu0 0.0
    %135 = vmatpush1.msra.mxu0 0.0
    %136 = vmatprep.subr.mxu0 0.0
    %137 = vmatpush1.msra.mxu0 0.0
    %138 = vmatprep.subr.mxu0 0.0
    %139 = vmatpush1.msra.mxu0 0.0
    %140 = vmatprep.subr.mxu0 0.0
    %141 = vmatpush1.msra.mxu0 0.0
    %142 = vmatprep.subr.mxu0 0.0
    %143 = vmatpush1.msra.mxu0 0.0
    %144 = vmatprep.subr.mxu0 0.0
    %145 = vmatpush1.msra.mxu0 0.0
    %146 = vmatprep.subr.mxu0 0.0
    %147 = vmatpush1.msra.mxu0 0.0
    %148 = vmatprep.subr.mxu0 0.0
    %149 = vmatpush1.msra.mxu0 0.0
    %150 = vmatprep.subr.mxu0 0.0
    %151 = vmatpush1.msra.mxu0 0.0
    %152 = vmatprep.subr.mxu0 0.0
    %153 = vmatpush1.msra.mxu0 0.0
    %154 = vmatprep.subr.mxu0 0.0
    %155 = vmatpush1.msra.mxu0 0.0
    %156 = vmatprep.subr.mxu0 0.0
    %157 = vmatpush1.msra.mxu0 0.0
    %158 = vmatprep.subr.mxu0 0.0
    %159 = vmatpush1.msra.mxu0 0.0
    %160 = vmatprep.subr.mxu0 0.0
    %161 = vmatpush1.msra.mxu0 0.0
    %162 = vmatprep.subr.mxu0 0.0
    %163 = vmatpush1.msra.mxu0 0.0
    %164 = vmatprep.mubr.f32.mxu0 0.0
    %165 = vmatmul.mubr.f32.gmra.mrb[0].mxu0 %v48
    %v166 = vpop.f32.mrb[0].mxu0
    %v167 = vadd.f32 0.0, %v166
    %v168 = vpop.f32.mrb[0].mxu0
    %v169 = vadd.f32 0.0, %v168
    %170 = vdwg.mxu0
    %171 = vmatprep.subr.mxu0 0.0
    %172 = vmatpush1.msra.mxu0 %v54
    %173 = vmatprep.subr.mxu0 0.0
    %174 = vmatpush1.msra.mxu0 %v57
    %175 = vmatprep.subr.mxu0 0.0
    %176 = vmatpush1.msra.mxu0 %v60
    %177 = vmatprep.subr.mxu0 0.0
    %178 = vmatpush1.msra.mxu0 %v63
    %179 = vmatprep.subr.mxu0 0.0
    %180 = vmatpush1.msra.mxu0 %v66
    %181 = vmatprep.subr.mxu0 0.0
    %182 = vmatpush1.msra.mxu0 %v69
    %183 = vmatprep.subr.mxu0 0.0
    %184 = vmatpush1.msra.mxu0 %v72
    %185 = vmatprep.subr.mxu0 0.0
    %186 = vmatpush1.msra.mxu0 %v75
    %187 = vmatprep.subr.mxu0 0.0
    %188 = vmatpush1.msra.mxu0 %v78
    %189 = vmatprep.subr.mxu0 0.0
    %190 = vmatpush1.msra.mxu0 %v81
    %191 = vmatprep.subr.mxu0 0.0
    %192 = vmatpush1.msra.mxu0 %v84
    %193 = vmatprep.subr.mxu0 0.0
    %194 = vmatpush1.msra.mxu0 %v87
    %195 = vmatprep.subr.mxu0 0.0
    %196 = vmatpush1.msra.mxu0 %v90
    %197 = vmatprep.subr.mxu0 0.0
    %198 = vmatpush1.msra.mxu0 %v93
    %199 = vmatprep.subr.mxu0 0.0
    %200 = vmatpush1.msra.mxu0 %v96
    %201 = vmatprep.subr.mxu0 0.0
    %202 = vmatpush1.msra.mxu0 %v99
    %203 = vmatprep.subr.mxu0 0.0
    %204 = vmatpush1.msra.mxu0 0.0
    %205 = vmatprep.subr.mxu0 0.0
    %206 = vmatpush1.msra.mxu0 0.0
    %207 = vmatprep.subr.mxu0 0.0
    %208 = vmatpush1.msra.mxu0 0.0
    %209 = vmatprep.subr.mxu0 0.0
    %210 = vmatpush1.msra.mxu0 0.0
    %211 = vmatprep.subr.mxu0 0.0
    %212 = vmatpush1.msra.mxu0 0.0
    %213 = vmatprep.subr.mxu0 0.0
    %214 = vmatpush1.msra.mxu0 0.0
    %215 = vmatprep.subr.mxu0 0.0
    %216 = vmatpush1.msra.mxu0 0.0
    %217 = vmatprep.subr.mxu0 0.0
    %218 = vmatpush1.msra.mxu0 0.0
    %219 = vmatprep.subr.mxu0 0.0
    %220 = vmatpush1.msra.mxu0 0.0
    %221 = vmatprep.subr.mxu0 0.0
    %222 = vmatpush1.msra.mxu0 0.0
    %223 = vmatprep.subr.mxu0 0.0
    %224 = vmatpush1.msra.mxu0 0.0
    %225 = vmatprep.subr.mxu0 0.0
    %226 = vmatpush1.msra.mxu0 0.0
    %227 = vmatprep.subr.mxu0 0.0
    %228 = vmatpush1.msra.mxu0 0.0
    %229 = vmatprep.subr.mxu0 0.0
    %230 = vmatpush1.msra.mxu0 0.0
    %231 = vmatprep.subr.mxu0 0.0
    %232 = vmatpush1.msra.mxu0 0.0
    %233 = vmatprep.subr.mxu0 0.0
    %234 = vmatpush1.msra.mxu0 0.0
    %235 = vmatprep.mubr.f32.mxu0 0.0
    %236 = vmatmul.mubr.f32.gmra.mrb[0].mxu0 %v48
    %v237 = vpop.f32.mrb[0].mxu0
    %v238 = vadd.f32 0.0, %v237
    %v239 = vpop.f32.mrb[0].mxu0
    %240 = vdwg.mxu0
    %v241 = vadd.f32 %v49, %v167
    %v242 = vxor.u32 %v241, 2147483648
    %v243 = vmul.f32 %v242, 1.442695
    %v244 = vpow.pop %v243
    %v245 = vadd.f32 %v244, 1.0
    %v246 = vrcp.pop %v245
    %v247 = vmul.f32 1.0, %v246
    %v248 = vadd.f32 %v50, %v169
    %v249 = vxor.u32 %v248, 2147483648
    %v250 = vmul.f32 %v249, 1.442695
    %v251 = vpow.pop %v250
    %v252 = vadd.f32 %v251, 1.0
    %v253 = vrcp.pop %v252
    %v254 = vmul.f32 1.0, %v253
    %v255 = vld [vmem:[%s2] sm:$0x1]
    %v257 = vlaneseq
    %v258 = vshrl.u32 %v257, 7
    %v259 = vsub.s32 0, %v258
    %v260 = vrot.slane %v255, %v259
    %v262 = vadd.f32 %v238, %v260
    %v263 = vmul.f32 %v247, %v262
    %v264 = vadd.f32 %v51, %v263
    %v265 = vtanh.pop %v264
    %v266 = vsub.f32 1.0, %v254
    %v267 = vmul.f32 %v266, %v265
    %v268 = vmul.f32 %v254, %v48
    %v269 = vadd.f32 %v267, %v268
    %270 = vst [vmem:[#allocation8] sm:$0xff] %v269
    %s271 = scalar_lea.vmem [#allocation3], 24
    %v272 = vld [vmem:[%s271] sm:$0xff]
    %v273 = vld [vmem:[%s271 + $0x8] sm:$0xff]
    %v274 = vld [vmem:[%s271 + $0x10] sm:$0xff]
    %v275 = vld [vmem:[#allocation6] sm:$0xff]
    %v276 = vld [vmem:[#allocation6 + $0x8] sm:$0xff]
    %v277 = vld [vmem:[#allocation6 + $0x10] sm:$0xff]
    %v278 = vld [vmem:[#allocation6 + $0x18] sm:$0xff]
    %v279 = vld [vmem:[#allocation6 + $0x20] sm:$0xff]
    %v280 = vld [vmem:[#allocation6 + $0x28] sm:$0xff]
    %v281 = vld [vmem:[#allocation6 + $0x30] sm:$0xff]
    %v282 = vld [vmem:[#allocation6 + $0x38] sm:$0xff]
    %v283 = vld [vmem:[#allocation6 + $0x40] sm:$0xff]
    %v284 = vld [vmem:[#allocation6 + $0x48] sm:$0xff]
    %v285 = vld [vmem:[#allocation6 + $0x50] sm:$0xff]
    %v286 = vld [vmem:[#allocation6 + $0x58] sm:$0xff]
    %v287 = vld [vmem:[#allocation6 + $0x60] sm:$0xff]
    %v288 = vld [vmem:[#allocation6 + $0x68] sm:$0xff]
    %v289 = vld [vmem:[#allocation6 + $0x70] sm:$0xff]
    %v290 = vld [vmem:[#allocation6 + $0x78] sm:$0xff]
    %v291 = vld [vmem:[#allocation6 + $0x80] sm:$0xff]
    %v292 = vld [vmem:[#allocation6 + $0x88] sm:$0xff]
    %v293 = vld [vmem:[#allocation6 + $0x90] sm:$0xff]
    %v294 = vld [vmem:[#allocation6 + $0x98] sm:$0xff]
    %v295 = vld [vmem:[#allocation6 + $0xa0] sm:$0xff]
    %v296 = vld [vmem:[#allocation6 + $0xa8] sm:$0xff]
    %v297 = vld [vmem:[#allocation6 + $0xb0] sm:$0xff]
    %v298 = vld [vmem:[#allocation6 + $0xb8] sm:$0xff]
    %v299 = vld [vmem:[#allocation6 + $0xc0] sm:$0xff]
    %v300 = vld [vmem:[#allocation6 + $0xc8] sm:$0xff]
    %v301 = vld [vmem:[#allocation6 + $0xd0] sm:$0xff]
    %v302 = vld [vmem:[#allocation6 + $0xd8] sm:$0xff]
    %v303 = vld [vmem:[#allocation6 + $0xe0] sm:$0xff]
    %v304 = vld [vmem:[#allocation6 + $0xe8] sm:$0xff]
    %v305 = vld [vmem:[#allocation6 + $0xf0] sm:$0xff]
    %v306 = vld [vmem:[#allocation6 + $0xf8] sm:$0xff]
    %v307 = vld [vmem:[#allocation6 + $0x100] sm:$0xff]
    %v308 = vld [vmem:[#allocation6 + $0x108] sm:$0xff]
    %v309 = vld [vmem:[#allocation6 + $0x110] sm:$0xff]
    %v310 = vld [vmem:[#allocation6 + $0x118] sm:$0xff]
    %v311 = vld [vmem:[#allocation6 + $0x120] sm:$0xff]
    %v312 = vld [vmem:[#allocation6 + $0x128] sm:$0xff]
    %v313 = vld [vmem:[#allocation6 + $0x130] sm:$0xff]
    %v314 = vld [vmem:[#allocation6 + $0x138] sm:$0xff]
    %v315 = vld [vmem:[#allocation6 + $0x140] sm:$0xff]
    %v316 = vld [vmem:[#allocation6 + $0x148] sm:$0xff]
    %v317 = vld [vmem:[#allocation6 + $0x150] sm:$0xff]
    %v318 = vld [vmem:[#allocation6 + $0x158] sm:$0xff]
    %v319 = vld [vmem:[#allocation6 + $0x160] sm:$0xff]
    %v320 = vld [vmem:[#allocation6 + $0x168] sm:$0xff]
    %v321 = vld [vmem:[#allocation6 + $0x170] sm:$0xff]
    %v322 = vld [vmem:[#allocation6 + $0x178] sm:$0xff]
    %323 = vmatprep.subr.mxu0 %v276
    %324 = vmatpush1.msra.mxu0 %v275
    %325 = vmatprep.subr.mxu0 %v279
    %326 = vmatpush1.msra.mxu0 %v278
    %327 = vmatprep.subr.mxu0 %v282
    %328 = vmatpush1.msra.mxu0 %v281
    %329 = vmatprep.subr.mxu0 %v285
    %330 = vmatpush1.msra.mxu0 %v284
    %331 = vmatprep.subr.mxu0 %v288
    %332 = vmatpush1.msra.mxu0 %v287
    %333 = vmatprep.subr.mxu0 %v291
    %334 = vmatpush1.msra.mxu0 %v290
    %335 = vmatprep.subr.mxu0 %v294
    %336 = vmatpush1.msra.mxu0 %v293
    %337 = vmatprep.subr.mxu0 %v297
    %338 = vmatpush1.msra.mxu0 %v296
    %339 = vmatprep.subr.mxu0 %v300
    %340 = vmatpush1.msra.mxu0 %v299
    %341 = vmatprep.subr.mxu0 %v303
    %342 = vmatpush1.msra.mxu0 %v302
    %343 = vmatprep.subr.mxu0 %v306
    %344 = vmatpush1.msra.mxu0 %v305
    %345 = vmatprep.subr.mxu0 %v309
    %346 = vmatpush1.msra.mxu0 %v308
    %347 = vmatprep.subr.mxu0 %v312
    %348 = vmatpush1.msra.mxu0 %v311
    %349 = vmatprep.subr.mxu0 %v315
    %350 = vmatpush1.msra.mxu0 %v314
    %351 = vmatprep.subr.mxu0 %v318
    %352 = vmatpush1.msra.mxu0 %v317
    %353 = vmatprep.subr.mxu0 %v321
    %354 = vmatpush1.msra.mxu0 %v320
    %355 = vmatprep.subr.mxu0 0.0
    %356 = vmatpush1.msra.mxu0 0.0
    %357 = vmatprep.subr.mxu0 0.0
    %358 = vmatpush1.msra.mxu0 0.0
    %359 = vmatprep.subr.mxu0 0.0
    %360 = vmatpush1.msra.mxu0 0.0
    %361 = vmatprep.subr.mxu0 0.0
    %362 = vmatpush1.msra.mxu0 0.0
    %363 = vmatprep.subr.mxu0 0.0
    %364 = vmatpush1.msra.mxu0 0.0
    %365 = vmatprep.subr.mxu0 0.0
    %366 = vmatpush1.msra.mxu0 0.0
    %367 = vmatprep.subr.mxu0 0.0
    %368 = vmatpush1.msra.mxu0 0.0
    %369 = vmatprep.subr.mxu0 0.0
    %370 = vmatpush1.msra.mxu0 0.0
    %371 = vmatprep.subr.mxu0 0.0
    %372 = vmatpush1.msra.mxu0 0.0
    %373 = vmatprep.subr.mxu0 0.0
    %374 = vmatpush1.msra.mxu0 0.0
    %375 = vmatprep.subr.mxu0 0.0
    %376 = vmatpush1.msra.mxu0 0.0
    %377 = vmatprep.subr.mxu0 0.0
    %378 = vmatpush1.msra.mxu0 0.0
    %379 = vmatprep.subr.mxu0 0.0
    %380 = vmatpush1.msra.mxu0 0.0
    %381 = vmatprep.subr.mxu0 0.0
    %382 = vmatpush1.msra.mxu0 0.0
    %383 = vmatprep.subr.mxu0 0.0
    %384 = vmatpush1.msra.mxu0 0.0
    %385 = vmatprep.subr.mxu0 0.0
    %386 = vmatpush1.msra.mxu0 0.0
    %387 = vmatprep.mubr.f32.mxu0 0.0
    %388 = vmatmul.mubr.f32.gmra.mrb[0].mxu0 %v269
    %v389 = vpop.f32.mrb[0].mxu0
    %v390 = vadd.f32 0.0, %v389
    %v391 = vpop.f32.mrb[0].mxu0
    %v392 = vadd.f32 0.0, %v391
    %393 = vdwg.mxu0
    %394 = vmatprep.subr.mxu0 0.0
    %395 = vmatpush1.msra.mxu0 %v277
    %396 = vmatprep.subr.mxu0 0.0
    %397 = vmatpush1.msra.mxu0 %v280
    %398 = vmatprep.subr.mxu0 0.0
    %399 = vmatpush1.msra.mxu0 %v283
    %400 = vmatprep.subr.mxu0 0.0
    %401 = vmatpush1.msra.mxu0 %v286
    %402 = vmatprep.subr.mxu0 0.0
    %403 = vmatpush1.msra.mxu0 %v289
    %404 = vmatprep.subr.mxu0 0.0
    %405 = vmatpush1.msra.mxu0 %v292
    %406 = vmatprep.subr.mxu0 0.0
    %407 = vmatpush1.msra.mxu0 %v295
    %408 = vmatprep.subr.mxu0 0.0
    %409 = vmatpush1.msra.mxu0 %v298
    %410 = vmatprep.subr.mxu0 0.0
    %411 = vmatpush1.msra.mxu0 %v301
    %412 = vmatprep.subr.mxu0 0.0
    %413 = vmatpush1.msra.mxu0 %v304
    %414 = vmatprep.subr.mxu0 0.0
    %415 = vmatpush1.msra.mxu0 %v307
    %416 = vmatprep.subr.mxu0 0.0
    %417 = vmatpush1.msra.mxu0 %v310
    %418 = vmatprep.subr.mxu0 0.0
    %419 = vmatpush1.msra.mxu0 %v313
    %420 = vmatprep.subr.mxu0 0.0
    %421 = vmatpush1.msra.mxu0 %v316
    %422 = vmatprep.subr.mxu0 0.0
    %423 = vmatpush1.msra.mxu0 %v319
    %424 = vmatprep.subr.mxu0 0.0
    %425 = vmatpush1.msra.mxu0 %v322
    %426 = vmatprep.subr.mxu0 0.0
    %427 = vmatpush1.msra.mxu0 0.0
    %428 = vmatprep.subr.mxu0 0.0
    %429 = vmatpush1.msra.mxu0 0.0
    %430 = vmatprep.subr.mxu0 0.0
    %431 = vmatpush1.msra.mxu0 0.0
    %432 = vmatprep.subr.mxu0 0.0
    %433 = vmatpush1.msra.mxu0 0.0
    %434 = vmatprep.subr.mxu0 0.0
    %435 = vmatpush1.msra.mxu0 0.0
    %436 = vmatprep.subr.mxu0 0.0
    %437 = vmatpush1.msra.mxu0 0.0
    %438 = vmatprep.subr.mxu0 0.0
    %439 = vmatpush1.msra.mxu0 0.0
    %440 = vmatprep.subr.mxu0 0.0
    %441 = vmatpush1.msra.mxu0 0.0
    %442 = vmatprep.subr.mxu0 0.0
    %443 = vmatpush1.msra.mxu0 0.0
    %444 = vmatprep.subr.mxu0 0.0
    %445 = vmatpush1.msra.mxu0 0.0
    %446 = vmatprep.subr.mxu0 0.0
    %447 = vmatpush1.msra.mxu0 0.0
    %448 = vmatprep.subr.mxu0 0.0
    %449 = vmatpush1.msra.mxu0 0.0
    %450 = vmatprep.subr.mxu0 0.0
    %451 = vmatpush1.msra.mxu0 0.0
    %452 = vmatprep.subr.mxu0 0.0
    %453 = vmatpush1.msra.mxu0 0.0
    %454 = vmatprep.subr.mxu0 0.0
    %455 = vmatpush1.msra.mxu0 0.0
    %456 = vmatprep.subr.mxu0 0.0
    %457 = vmatpush1.msra.mxu0 0.0
    %458 = vmatprep.mubr.f32.mxu0 0.0
    %459 = vmatmul.mubr.f32.gmra.mrb[0].mxu0 %v269
    %v460 = vpop.f32.mrb[0].mxu0
    %v461 = vadd.f32 0.0, %v460
    %v462 = vpop.f32.mrb[0].mxu0
    %463 = vdwg.mxu0
    %v464 = vadd.f32 %v272, %v390
    %v465 = vxor.u32 %v464, 2147483648
    %v466 = vmul.f32 %v465, 1.442695
    %v467 = vpow.pop %v466
    %v468 = vadd.f32 %v467, 1.0
    %v469 = vrcp.pop %v468
    %v470 = vmul.f32 1.0, %v469
    %v471 = vadd.f32 %v273, %v392
    %v472 = vxor.u32 %v471, 2147483648
    %v473 = vmul.f32 %v472, 1.442695
    %v474 = vpow.pop %v473
    %v475 = vadd.f32 %v474, 1.0
    %v476 = vrcp.pop %v475
    %v477 = vmul.f32 1.0, %v476
    %v478 = vld [vmem:[%s2] sm:$0x1]
    %v480 = vlaneseq
    %v481 = vshrl.u32 %v480, 7
    %v482 = vsub.s32 0, %v481
    %v483 = vrot.slane %v478, %v482
    %v485 = vadd.f32 %v461, %v483
    %v486 = vmul.f32 %v470, %v485
    %v487 = vadd.f32 %v274, %v486
    %v488 = vtanh.pop %v487
    %v489 = vsub.f32 1.0, %v477
    %v490 = vmul.f32 %v489, %v488
    %v491 = vmul.f32 %v477, %v269
    %v492 = vadd.f32 %v490, %v491
    %s493 = scalar_lea.vmem [#allocation8], 8
    %494 = vst [vmem:[%s493] sm:$0xff] %v492
    %s495 = scalar_lea.vmem [#allocation3], 48
    %v496 = vld [vmem:[%s495] sm:$0xff]
    %v497 = vld [vmem:[%s495 + $0x8] sm:$0xff]
    %v498 = vld [vmem:[%s495 + $0x10] sm:$0xff]
    %v499 = vld [vmem:[#allocation6] sm:$0xff]
    %v500 = vld [vmem:[#allocation6 + $0x8] sm:$0xff]
    %v501 = vld [vmem:[#allocation6 + $0x10] sm:$0xff]
    %v502 = vld [vmem:[#allocation6 + $0x18] sm:$0xff]
    %v503 = vld [vmem:[#allocation6 + $0x20] sm:$0xff]
    %v504 = vld [vmem:[#allocation6 + $0x28] sm:$0xff]
    %v505 = vld [vmem:[#allocation6 + $0x30] sm:$0xff]
    %v506 = vld [vmem:[#allocation6 + $0x38] sm:$0xff]
    %v507 = vld [vmem:[#allocation6 + $0x40] sm:$0xff]
    %v508 = vld [vmem:[#allocation6 + $0x48] sm:$0xff]
    %v509 = vld [vmem:[#allocation6 + $0x50] sm:$0xff]
    %v510 = vld [vmem:[#allocation6 + $0x58] sm:$0xff]
    %v511 = vld [vmem:[#allocation6 + $0x60] sm:$0xff]
    %v512 = vld [vmem:[#allocation6 + $0x68] sm:$0xff]
    %v513 = vld [vmem:[#allocation6 + $0x70] sm:$0xff]
    %v514 = vld [vmem:[#allocation6 + $0x78] sm:$0xff]
    %v515 = vld [vmem:[#allocation6 + $0x80] sm:$0xff]
    %v516 = vld [vmem:[#allocation6 + $0x88] sm:$0xff]
    %v517 = vld [vmem:[#allocation6 + $0x90] sm:$0xff]
    %v518 = vld [vmem:[#allocation6 + $0x98] sm:$0xff]
    %v519 = vld [vmem:[#allocation6 + $0xa0] sm:$0xff]
    %v520 = vld [vmem:[#allocation6 + $0xa8] sm:$0xff]
    %v521 = vld [vmem:[#allocation6 + $0xb0] sm:$0xff]
    %v522 = vld [vmem:[#allocation6 + $0xb8] sm:$0xff]
    %v523 = vld [vmem:[#allocation6 + $0xc0] sm:$0xff]
    %v524 = vld [vmem:[#allocation6 + $0xc8] sm:$0xff]
    %v525 = vld [vmem:[#allocation6 + $0xd0] sm:$0xff]
    %v526 = vld [vmem:[#allocation6 + $0xd8] sm:$0xff]
    %v527 = vld [vmem:[#allocation6 + $0xe0] sm:$0xff]
    %v528 = vld [vmem:[#allocation6 + $0xe8] sm:$0xff]
    %v529 = vld [vmem:[#allocation6 + $0xf0] sm:$0xff]
    %v530 = vld [vmem:[#allocation6 + $0xf8] sm:$0xff]
    %v531 = vld [vmem:[#allocation6 + $0x100] sm:$0xff]
    %v532 = vld [vmem:[#allocation6 + $0x108] sm:$0xff]
    %v533 = vld [vmem:[#allocation6 + $0x110] sm:$0xff]
    %v534 = vld [vmem:[#allocation6 + $0x118] sm:$0xff]
    %v535 = vld [vmem:[#allocation6 + $0x120] sm:$0xff]
    %v536 = vld [vmem:[#allocation6 + $0x128] sm:$0xff]
    %v537 = vld [vmem:[#allocation6 + $0x130] sm:$0xff]
    %v538 = vld [vmem:[#allocation6 + $0x138] sm:$0xff]
    %v539 = vld [vmem:[#allocation6 + $0x140] sm:$0xff]
    %v540 = vld [vmem:[#allocation6 + $0x148] sm:$0xff]
    %v541 = vld [vmem:[#allocation6 + $0x150] sm:$0xff]
    %v542 = vld [vmem:[#allocation6 + $0x158] sm:$0xff]
    %v543 = vld [vmem:[#allocation6 + $0x160] sm:$0xff]
    %v544 = vld [vmem:[#allocation6 + $0x168] sm:$0xff]
    %v545 = vld [vmem:[#allocation6 + $0x170] sm:$0xff]
    %v546 = vld [vmem:[#allocation6 + $0x178] sm:$0xff]
    %547 = vmatprep.subr.mxu0 %v500
    %548 = vmatpush1.msra.mxu0 %v499
    %549 = vmatprep.subr.mxu0 %v503
    %550 = vmatpush1.msra.mxu0 %v502
    %551 = vmatprep.subr.mxu0 %v506
    %552 = vmatpush1.msra.mxu0 %v505
    %553 = vmatprep.subr.mxu0 %v509
    %554 = vmatpush1.msra.mxu0 %v508
    %555 = vmatprep.subr.mxu0 %v512
    %556 = vmatpush1.msra.mxu0 %v511
    %557 = vmatprep.subr.mxu0 %v515
    %558 = vmatpush1.msra.mxu0 %v514
    %559 = vmatprep.subr.mxu0 %v518
    %560 = vmatpush1.msra.mxu0 %v517
    %561 = vmatprep.subr.mxu0 %v521
    %562 = vmatpush1.msra.mxu0 %v520
    %563 = vmatprep.subr.mxu0 %v524
    %564 = vmatpush1.msra.mxu0 %v523
    %565 = vmatprep.subr.mxu0 %v527
    %566 = vmatpush1.msra.mxu0 %v526
    %567 = vmatprep.subr.mxu0 %v530
    %568 = vmatpush1.msra.mxu0 %v529
    %569 = vmatprep.subr.mxu0 %v533
    %570 = vmatpush1.msra.mxu0 %v532
    %571 = vmatprep.subr.mxu0 %v536
    %572 = vmatpush1.msra.mxu0 %v535
    %573 = vmatprep.subr.mxu0 %v539
    %574 = vmatpush1.msra.mxu0 %v538
    %575 = vmatprep.subr.mxu0 %v542
    %576 = vmatpush1.msra.mxu0 %v541
    %577 = vmatprep.subr.mxu0 %v545
    %578 = vmatpush1.msra.mxu0 %v544
    %579 = vmatprep.subr.mxu0 0.0
    %580 = vmatpush1.msra.mxu0 0.0
    %581 = vmatprep.subr.mxu0 0.0
    %582 = vmatpush1.msra.mxu0 0.0
    %583 = vmatprep.subr.mxu0 0.0
    %584 = vmatpush1.msra.mxu0 0.0
    %585 = vmatprep.subr.mxu0 0.0
    %586 = vmatpush1.msra.mxu0 0.0
    %587 = vmatprep.subr.mxu0 0.0
    %588 = vmatpush1.msra.mxu0 0.0
    %589 = vmatprep.subr.mxu0 0.0
    %590 = vmatpush1.msra.mxu0 0.0
    %591 = vmatprep.subr.mxu0 0.0
    %592 = vmatpush1.msra.mxu0 0.0
    %593 = vmatprep.subr.mxu0 0.0
    %594 = vmatpush1.msra.mxu0 0.0
    %595 = vmatprep.subr.mxu0 0.0
    %596 = vmatpush1.msra.mxu0 0.0
    %597 = vmatprep.subr.mxu0 0.0
    %598 = vmatpush1.msra.mxu0 0.0
    %599 = vmatprep.subr.mxu0 0.0
    %600 = vmatpush1.msra.mxu0 0.0
    %601 = vmatprep.subr.mxu0 0.0
    %602 = vmatpush1.msra.mxu0 0.0
    %603 = vmatprep.subr.mxu0 0.0
    %604 = vmatpush1.msra.mxu0 0.0
    %605 = vmatprep.subr.mxu0 0.0
    %606 = vmatpush1.msra.mxu0 0.0
    %607 = vmatprep.subr.mxu0 0.0
    %608 = vmatpush1.msra.mxu0 0.0
    %609 = vmatprep.subr.mxu0 0.0
    %610 = vmatpush1.msra.mxu0 0.0
    %611 = vmatprep.mubr.f32.mxu0 0.0
    %612 = vmatmul.mubr.f32.gmra.mrb[0].mxu0 %v492
    %v613 = vpop.f32.mrb[0].mxu0
    %v614 = vadd.f32 0.0, %v613
    %v615 = vpop.f32.mrb[0].mxu0
    %v616 = vadd.f32 0.0, %v615
    %617 = vdwg.mxu0
    %618 = vmatprep.subr.mxu0 0.0
    %619 = vmatpush1.msra.mxu0 %v501
    %620 = vmatprep.subr.mxu0 0.0
    %621 = vmatpush1.msra.mxu0 %v504
    %622 = vmatprep.subr.mxu0 0.0
    %623 = vmatpush1.msra.mxu0 %v507
    %624 = vmatprep.subr.mxu0 0.0
    %625 = vmatpush1.msra.mxu0 %v510
    %626 = vmatprep.subr.mxu0 0.0
    %627 = vmatpush1.msra.mxu0 %v513
    %628 = vmatprep.subr.mxu0 0.0
    %629 = vmatpush1.msra.mxu0 %v516
    %630 = vmatprep.subr.mxu0 0.0
    %631 = vmatpush1.msra.mxu0 %v519
    %632 = vmatprep.subr.mxu0 0.0
    %633 = vmatpush1.msra.mxu0 %v522
    %634 = vmatprep.subr.mxu0 0.0
    %635 = vmatpush1.msra.mxu0 %v525
    %636 = vmatprep.subr.mxu0 0.0
    %637 = vmatpush1.msra.mxu0 %v528
    %638 = vmatprep.subr.mxu0 0.0
    %639 = vmatpush1.msra.mxu0 %v531
    %640 = vmatprep.subr.mxu0 0.0
    %641 = vmatpush1.msra.mxu0 %v534
    %642 = vmatprep.subr.mxu0 0.0
    %643 = vmatpush1.msra.mxu0 %v537
    %644 = vmatprep.subr.mxu0 0.0
    %645 = vmatpush1.msra.mxu0 %v540
    %646 = vmatprep.subr.mxu0 0.0
    %647 = vmatpush1.msra.mxu0 %v543
    %648 = vmatprep.subr.mxu0 0.0
    %649 = vmatpush1.msra.mxu0 %v546
    %650 = vmatprep.subr.mxu0 0.0
    %651 = vmatpush1.msra.mxu0 0.0
    %652 = vmatprep.subr.mxu0 0.0
    %653 = vmatpush1.msra.mxu0 0.0
    %654 = vmatprep.subr.mxu0 0.0
    %655 = vmatpush1.msra.mxu0 0.0
    %656 = vmatprep.subr.mxu0 0.0
    %657 = vmatpush1.msra.mxu0 0.0
    %658 = vmatprep.subr.mxu0 0.0
    %659 = vmatpush1.msra.mxu0 0.0
    %660 = vmatprep.subr.mxu0 0.0
    %661 = vmatpush1.msra.mxu0 0.0
    %662 = vmatprep.subr.mxu0 0.0
    %663 = vmatpush1.msra.mxu0 0.0
    %664 = vmatprep.subr.mxu0 0.0
    %665 = vmatpush1.msra.mxu0 0.0
    %666 = vmatprep.subr.mxu0 0.0
    %667 = vmatpush1.msra.mxu0 0.0
    %668 = vmatprep.subr.mxu0 0.0
    %669 = vmatpush1.msra.mxu0 0.0
    %670 = vmatprep.subr.mxu0 0.0
    %671 = vmatpush1.msra.mxu0 0.0
    %672 = vmatprep.subr.mxu0 0.0
    %673 = vmatpush1.msra.mxu0 0.0
    %674 = vmatprep.subr.mxu0 0.0
    %675 = vmatpush1.msra.mxu0 0.0
    %676 = vmatprep.subr.mxu0 0.0
    %677 = vmatpush1.msra.mxu0 0.0
    %678 = vmatprep.subr.mxu0 0.0
    %679 = vmatpush1.msra.mxu0 0.0
    %680 = vmatprep.subr.mxu0 0.0
    %681 = vmatpush1.msra.mxu0 0.0
    %682 = vmatprep.mubr.f32.mxu0 0.0
    %683 = vmatmul.mubr.f32.gmra.mrb[0].mxu0 %v492
    %v684 = vpop.f32.mrb[0].mxu0
    %v685 = vadd.f32 0.0, %v684
    %v686 = vpop.f32.mrb[0].mxu0
    %687 = vdwg.mxu0
    %v688 = vadd.f32 %v496, %v614
    %v689 = vxor.u32 %v688, 2147483648
    %v690 = vmul.f32 %v689, 1.442695
    %v691 = vpow.pop %v690
    %v692 = vadd.f32 %v691, 1.0
    %v693 = vrcp.pop %v692
    %v694 = vmul.f32 1.0, %v693
    %v695 = vadd.f32 %v497, %v616
    %v696 = vxor.u32 %v695, 2147483648
    %v697 = vmul.f32 %v696, 1.442695
    %v698 = vpow.pop %v697
    %v699 = vadd.f32 %v698, 1.0
    %v700 = vrcp.pop %v699
    %v701 = vmul.f32 1.0, %v700
    %v702 = vld [vmem:[%s2] sm:$0x1]
    %v704 = vlaneseq
    %v705 = vshrl.u32 %v704, 7
    %v706 = vsub.s32 0, %v705
    %v707 = vrot.slane %v702, %v706
    %v709 = vadd.f32 %v685, %v707
    %v710 = vmul.f32 %v694, %v709
    %v711 = vadd.f32 %v498, %v710
    %v712 = vtanh.pop %v711
    %v713 = vsub.f32 1.0, %v701
    %v714 = vmul.f32 %v713, %v712
    %v715 = vmul.f32 %v701, %v492
    %v716 = vadd.f32 %v714, %v715
    %s717 = scalar_lea.vmem [#allocation8], 16
    %718 = vst [vmem:[%s717] sm:$0xff] %v716
    %s719 = scalar_lea.vmem [#allocation3], 72
    %v720 = vld [vmem:[%s719] sm:$0xff]
    %v721 = vld [vmem:[%s719 + $0x8] sm:$0xff]
    %v722 = vld [vmem:[%s719 + $0x10] sm:$0xff]
    %v723 = vld [vmem:[#allocation6] sm:$0xff]
    %v724 = vld [vmem:[#allocation6 + $0x8] sm:$0xff]
    %v725 = vld [vmem:[#allocation6 + $0x10] sm:$0xff]
    %v726 = vld [vmem:[#allocation6 + $0x18] sm:$0xff]
    %v727 = vld [vmem:[#allocation6 + $0x20] sm:$0xff]
    %v728 = vld [vmem:[#allocation6 + $0x28] sm:$0xff]
    %v729 = vld [vmem:[#allocation6 + $0x30] sm:$0xff]
    %v730 = vld [vmem:[#allocation6 + $0x38] sm:$0xff]
    %v731 = vld [vmem:[#allocation6 + $0x40] sm:$0xff]
    %v732 = vld [vmem:[#allocation6 + $0x48] sm:$0xff]
    %v733 = vld [vmem:[#allocation6 + $0x50] sm:$0xff]
    %v734 = vld [vmem:[#allocation6 + $0x58] sm:$0xff]
    %v735 = vld [vmem:[#allocation6 + $0x60] sm:$0xff]
    %v736 = vld [vmem:[#allocation6 + $0x68] sm:$0xff]
    %v737 = vld [vmem:[#allocation6 + $0x70] sm:$0xff]
    %v738 = vld [vmem:[#allocation6 + $0x78] sm:$0xff]
    %v739 = vld [vmem:[#allocation6 + $0x80] sm:$0xff]
    %v740 = vld [vmem:[#allocation6 + $0x88] sm:$0xff]
    %v741 = vld [vmem:[#allocation6 + $0x90] sm:$0xff]
    %v742 = vld [vmem:[#allocation6 + $0x98] sm:$0xff]
    %v743 = vld [vmem:[#allocation6 + $0xa0] sm:$0xff]
    %v744 = vld [vmem:[#allocation6 + $0xa8] sm:$0xff]
    %v745 = vld [vmem:[#allocation6 + $0xb0] sm:$0xff]
    %v746 = vld [vmem:[#allocation6 + $0xb8] sm:$0xff]
    %v747 = vld [vmem:[#allocation6 + $0xc0] sm:$0xff]
    %v748 = vld [vmem:[#allocation6 + $0xc8] sm:$0xff]
    %v749 = vld [vmem:[#allocation6 + $0xd0] sm:$0xff]
    %v750 = vld [vmem:[#allocation6 + $0xd8] sm:$0xff]
    %v751 = vld [vmem:[#allocation6 + $0xe0] sm:$0xff]
    %v752 = vld [vmem:[#allocation6 + $0xe8] sm:$0xff]
    %v753 = vld [vmem:[#allocation6 + $0xf0] sm:$0xff]
    %v754 = vld [vmem:[#allocation6 + $0xf8] sm:$0xff]
    %v755 = vld [vmem:[#allocation6 + $0x100] sm:$0xff]
    %v756 = vld [vmem:[#allocation6 + $0x108] sm:$0xff]
    %v757 = vld [vmem:[#allocation6 + $0x110] sm:$0xff]
    %v758 = vld [vmem:[#allocation6 + $0x118] sm:$0xff]
    %v759 = vld [vmem:[#allocation6 + $0x120] sm:$0xff]
    %v760 = vld [vmem:[#allocation6 + $0x128] sm:$0xff]
    %v761 = vld [vmem:[#allocation6 + $0x130] sm:$0xff]
    %v762 = vld [vmem:[#allocation6 + $0x138] sm:$0xff]
    %v763 = vld [vmem:[#allocation6 + $0x140] sm:$0xff]
    %v764 = vld [vmem:[#allocation6 + $0x148] sm:$0xff]
    %v765 = vld [vmem:[#allocation6 + $0x150] sm:$0xff]
    %v766 = vld [vmem:[#allocation6 + $0x158] sm:$0xff]
    %v767 = vld [vmem:[#allocation6 + $0x160] sm:$0xff]
    %v768 = vld [vmem:[#allocation6 + $0x168] sm:$0xff]
    %v769 = vld [vmem:[#allocation6 + $0x170] sm:$0xff]
    %v770 = vld [vmem:[#allocation6 + $0x178] sm:$0xff]
    %771 = vmatprep.subr.mxu0 %v724
    %772 = vmatpush1.msra.mxu0 %v723
    %773 = vmatprep.subr.mxu0 %v727
    %774 = vmatpush1.msra.mxu0 %v726
    %775 = vmatprep.subr.mxu0 %v730
    %776 = vmatpush1.msra.mxu0 %v729
    %777 = vmatprep.subr.mxu0 %v733
    %778 = vmatpush1.msra.mxu0 %v732
    %779 = vmatprep.subr.mxu0 %v736
    %780 = vmatpush1.msra.mxu0 %v735
    %781 = vmatprep.subr.mxu0 %v739
    %782 = vmatpush1.msra.mxu0 %v738
    %783 = vmatprep.subr.mxu0 %v742
    %784 = vmatpush1.msra.mxu0 %v741
    %785 = vmatprep.subr.mxu0 %v745
    %786 = vmatpush1.msra.mxu0 %v744
    %787 = vmatprep.subr.mxu0 %v748
    %788 = vmatpush1.msra.mxu0 %v747
    %789 = vmatprep.subr.mxu0 %v751
    %790 = vmatpush1.msra.mxu0 %v750
    %791 = vmatprep.subr.mxu0 %v754
    %792 = vmatpush1.msra.mxu0 %v753
    %793 = vmatprep.subr.mxu0 %v757
    %794 = vmatpush1.msra.mxu0 %v756
    %795 = vmatprep.subr.mxu0 %v760
    %796 = vmatpush1.msra.mxu0 %v759
    %797 = vmatprep.subr.mxu0 %v763
    %798 = vmatpush1.msra.mxu0 %v762
    %799 = vmatprep.subr.mxu0 %v766
    %800 = vmatpush1.msra.mxu0 %v765
    %801 = vmatprep.subr.mxu0 %v769
    %802 = vmatpush1.msra.mxu0 %v768
    %803 = vmatprep.subr.mxu0 0.0
    %804 = vmatpush1.msra.mxu0 0.0
    %805 = vmatprep.subr.mxu0 0.0
    %806 = vmatpush1.msra.mxu0 0.0
    %807 = vmatprep.subr.mxu0 0.0
    %808 = vmatpush1.msra.mxu0 0.0
    %809 = vmatprep.subr.mxu0 0.0
    %810 = vmatpush1.msra.mxu0 0.0
    %811 = vmatprep.subr.mxu0 0.0
    %812 = vmatpush1.msra.mxu0 0.0
    %813 = vmatprep.subr.mxu0 0.0
    %814 = vmatpush1.msra.mxu0 0.0
    %815 = vmatprep.subr.mxu0 0.0
    %816 = vmatpush1.msra.mxu0 0.0
    %817 = vmatprep.subr.mxu0 0.0
    %818 = vmatpush1.msra.mxu0 0.0
    %819 = vmatprep.subr.mxu0 0.0
    %820 = vmatpush1.msra.mxu0 0.0
    %821 = vmatprep.subr.mxu0 0.0
    %822 = vmatpush1.msra.mxu0 0.0
    %823 = vmatprep.subr.mxu0 0.0
    %824 = vmatpush1.msra.mxu0 0.0
    %825 = vmatprep.subr.mxu0 0.0
    %826 = vmatpush1.msra.mxu0 0.0
    %827 = vmatprep.subr.mxu0 0.0
    %828 = vmatpush1.msra.mxu0 0.0
    %829 = vmatprep.subr.mxu0 0.0
    %830 = vmatpush1.msra.mxu0 0.0
    %831 = vmatprep.subr.mxu0 0.0
    %832 = vmatpush1.msra.mxu0 0.0
    %833 = vmatprep.subr.mxu0 0.0
    %834 = vmatpush1.msra.mxu0 0.0
    %835 = vmatprep.mubr.f32.mxu0 0.0
    %836 = vmatmul.mubr.f32.gmra.mrb[0].mxu0 %v716
    %v837 = vpop.f32.mrb[0].mxu0
    %v838 = vadd.f32 0.0, %v837
    %v839 = vpop.f32.mrb[0].mxu0
    %v840 = vadd.f32 0.0, %v839
    %841 = vdwg.mxu0
    %842 = vmatprep.subr.mxu0 0.0
    %843 = vmatpush1.msra.mxu0 %v725
    %844 = vmatprep.subr.mxu0 0.0
    %845 = vmatpush1.msra.mxu0 %v728
    %846 = vmatprep.subr.mxu0 0.0
    %847 = vmatpush1.msra.mxu0 %v731
    %848 = vmatprep.subr.mxu0 0.0
    %849 = vmatpush1.msra.mxu0 %v734
    %850 = vmatprep.subr.mxu0 0.0
    %851 = vmatpush1.msra.mxu0 %v737
    %852 = vmatprep.subr.mxu0 0.0
    %853 = vmatpush1.msra.mxu0 %v740
    %854 = vmatprep.subr.mxu0 0.0
    %855 = vmatpush1.msra.mxu0 %v743
    %856 = vmatprep.subr.mxu0 0.0
    %857 = vmatpush1.msra.mxu0 %v746
    %858 = vmatprep.subr.mxu0 0.0
    %859 = vmatpush1.msra.mxu0 %v749
    %860 = vmatprep.subr.mxu0 0.0
    %861 = vmatpush1.msra.mxu0 %v752
    %862 = vmatprep.subr.mxu0 0.0
    %863 = vmatpush1.msra.mxu0 %v755
    %864 = vmatprep.subr.mxu0 0.0
    %865 = vmatpush1.msra.mxu0 %v758
    %866 = vmatprep.subr.mxu0 0.0
    %867 = vmatpush1.msra.mxu0 %v761
    %868 = vmatprep.subr.mxu0 0.0
    %869 = vmatpush1.msra.mxu0 %v764
    %870 = vmatprep.subr.mxu0 0.0
    %871 = vmatpush1.msra.mxu0 %v767
    %872 = vmatprep.subr.mxu0 0.0
    %873 = vmatpush1.msra.mxu0 %v770
    %874 = vmatprep.subr.mxu0 0.0
    %875 = vmatpush1.msra.mxu0 0.0
    %876 = vmatprep.subr.mxu0 0.0
    %877 = vmatpush1.msra.mxu0 0.0
    %878 = vmatprep.subr.mxu0 0.0
    %879 = vmatpush1.msra.mxu0 0.0
    %880 = vmatprep.subr.mxu0 0.0
    %881 = vmatpush1.msra.mxu0 0.0
    %882 = vmatprep.subr.mxu0 0.0
    %883 = vmatpush1.msra.mxu0 0.0
    %884 = vmatprep.subr.mxu0 0.0
    %885 = vmatpush1.msra.mxu0 0.0
    %886 = vmatprep.subr.mxu0 0.0
    %887 = vmatpush1.msra.mxu0 0.0
    %888 = vmatprep.subr.mxu0 0.0
    %889 = vmatpush1.msra.mxu0 0.0
    %890 = vmatprep.subr.mxu0 0.0
    %891 = vmatpush1.msra.mxu0 0.0
    %892 = vmatprep.subr.mxu0 0.0
    %893 = vmatpush1.msra.mxu0 0.0
    %894 = vmatprep.subr.mxu0 0.0
    %895 = vmatpush1.msra.mxu0 0.0
    %896 = vmatprep.subr.mxu0 0.0
    %897 = vmatpush1.msra.mxu0 0.0
    %898 = vmatprep.subr.mxu0 0.0
    %899 = vmatpush1.msra.mxu0 0.0
    %900 = vmatprep.subr.mxu0 0.0
    %901 = vmatpush1.msra.mxu0 0.0
    %902 = vmatprep.subr.mxu0 0.0
    %903 = vmatpush1.msra.mxu0 0.0
    %904 = vmatprep.subr.mxu0 0.0
    %905 = vmatpush1.msra.mxu0 0.0
    %906 = vmatprep.mubr.f32.mxu0 0.0
    %907 = vmatmul.mubr.f32.gmra.mrb[0].mxu0 %v716
    %v908 = vpop.f32.mrb[0].mxu0
    %v909 = vadd.f32 0.0, %v908
    %v910 = vpop.f32.mrb[0].mxu0
    %911 = vdwg.mxu0
    %v912 = vadd.f32 %v720, %v838
    %v913 = vxor.u32 %v912, 2147483648
    %v914 = vmul.f32 %v913, 1.442695
    %v915 = vpow.pop %v914
    %v916 = vadd.f32 %v915, 1.0
    %v917 = vrcp.pop %v916
    %v918 = vmul.f32 1.0, %v917
    %v919 = vadd.f32 %v721, %v840
    %v920 = vxor.u32 %v919, 2147483648
    %v921 = vmul.f32 %v920, 1.442695
    %v922 = vpow.pop %v921
    %v923 = vadd.f32 %v922, 1.0
    %v924 = vrcp.pop %v923
    %v925 = vmul.f32 1.0, %v924
    %v926 = vld [vmem:[%s2] sm:$0x1]
    %v928 = vlaneseq
    %v929 = vshrl.u32 %v928, 7
    %v930 = vsub.s32 0, %v929
    %v931 = vrot.slane %v926, %v930
    %v933 = vadd.f32 %v909, %v931
    %v934 = vmul.f32 %v918, %v933
    %v935 = vadd.f32 %v722, %v934
    %v936 = vtanh.pop %v935
    %v937 = vsub.f32 1.0, %v925
    %v938 = vmul.f32 %v937, %v936
    %v939 = vmul.f32 %v925, %v716
    %v940 = vadd.f32 %v938, %v939
    %s941 = scalar_lea.vmem [#allocation8], 24
    %942 = vst [vmem:[%s941] sm:$0xff] %v940
    %s943 = scalar_lea.vmem [#allocation3], 96
    %v944 = vld [vmem:[%s943] sm:$0xff]
    %v945 = vld [vmem:[%s943 + $0x8] sm:$0xff]
    %v946 = vld [vmem:[%s943 + $0x10] sm:$0xff]
    %v947 = vld [vmem:[#allocation6] sm:$0xff]
    %v948 = vld [vmem:[#allocation6 + $0x8] sm:$0xff]
    %v949 = vld [vmem:[#allocation6 + $0x10] sm:$0xff]
    %v950 = vld [vmem:[#allocation6 + $0x18] sm:$0xff]
    %v951 = vld [vmem:[#allocation6 + $0x20] sm:$0xff]
    %v952 = vld [vmem:[#allocation6 + $0x28] sm:$0xff]
    %v953 = vld [vmem:[#allocation6 + $0x30] sm:$0xff]
    %v954 = vld [vmem:[#allocation6 + $0x38] sm:$0xff]
    %v955 = vld [vmem:[#allocation6 + $0x40] sm:$0xff]
    %v956 = vld [vmem:[#allocation6 + $0x48] sm:$0xff]
    %v957 = vld [vmem:[#allocation6 + $0x50] sm:$0xff]
    %v958 = vld [vmem:[#allocation6 + $0x58] sm:$0xff]
    %v959 = vld [vmem:[#allocation6 + $0x60] sm:$0xff]
    %v960 = vld [vmem:[#allocation6 + $0x68] sm:$0xff]
    %v961 = vld [vmem:[#allocation6 + $0x70] sm:$0xff]
    %v962 = vld [vmem:[#allocation6 + $0x78] sm:$0xff]
    %v963 = vld [vmem:[#allocation6 + $0x80] sm:$0xff]
    %v964 = vld [vmem:[#allocation6 + $0x88] sm:$0xff]
    %v965 = vld [vmem:[#allocation6 + $0x90] sm:$0xff]
    %v966 = vld [vmem:[#allocation6 + $0x98] sm:$0xff]
    %v967 = vld [vmem:[#allocation6 + $0xa0] sm:$0xff]
    %v968 = vld [vmem:[#allocation6 + $0xa8] sm:$0xff]
    %v969 = vld [vmem:[#allocation6 + $0xb0] sm:$0xff]
    %v970 = vld [vmem:[#allocation6 + $0xb8] sm:$0xff]
    %v971 = vld [vmem:[#allocation6 + $0xc0] sm:$0xff]
    %v972 = vld [vmem:[#allocation6 + $0xc8] sm:$0xff]
    %v973 = vld [vmem:[#allocation6 + $0xd0] sm:$0xff]
    %v974 = vld [vmem:[#allocation6 + $0xd8] sm:$0xff]
    %v975 = vld [vmem:[#allocation6 + $0xe0] sm:$0xff]
    %v976 = vld [vmem:[#allocation6 + $0xe8] sm:$0xff]
    %v977 = vld [vmem:[#allocation6 + $0xf0] sm:$0xff]
    %v978 = vld [vmem:[#allocation6 + $0xf8] sm:$0xff]
    %v979 = vld [vmem:[#allocation6 + $0x100] sm:$0xff]
    %v980 = vld [vmem:[#allocation6 + $0x108] sm:$0xff]
    %v981 = vld [vmem:[#allocation6 + $0x110] sm:$0xff]
    %v982 = vld [vmem:[#allocation6 + $0x118] sm:$0xff]
    %v983 = vld [vmem:[#allocation6 + $0x120] sm:$0xff]
    %v984 = vld [vmem:[#allocation6 + $0x128] sm:$0xff]
    %v985 = vld [vmem:[#allocation6 + $0x130] sm:$0xff]
    %v986 = vld [vmem:[#allocation6 + $0x138] sm:$0xff]
    %v987 = vld [vmem:[#allocation6 + $0x140] sm:$0xff]
    %v988 = vld [vmem:[#allocation6 + $0x148] sm:$0xff]
    %v989 = vld [vmem:[#allocation6 + $0x150] sm:$0xff]
    %v990 = vld [vmem:[#allocation6 + $0x158] sm:$0xff]
    %v991 = vld [vmem:[#allocation6 + $0x160] sm:$0xff]
    %v992 = vld [vmem:[#allocation6 + $0x168] sm:$0xff]
    %v993 = vld [vmem:[#allocation6 + $0x170] sm:$0xff]
    %v994 = vld [vmem:[#allocation6 + $0x178] sm:$0xff]
    %995 = vmatprep.subr.mxu0 %v948
    %996 = vmatpush1.msra.mxu0 %v947
    %997 = vmatprep.subr.mxu0 %v951
    %998 = vmatpush1.msra.mxu0 %v950
    %999 = vmatprep.subr.mxu0 %v954
    %1000 = vmatpush1.msra.mxu0 %v953
    %1001 = vmatprep.subr.mxu0 %v957
    %1002 = vmatpush1.msra.mxu0 %v956
    %1003 = vmatprep.subr.mxu0 %v960
    %1004 = vmatpush1.msra.mxu0 %v959
    %1005 = vmatprep.subr.mxu0 %v963
    %1006 = vmatpush1.msra.mxu0 %v962
    %1007 = vmatprep.subr.mxu0 %v966
    %1008 = vmatpush1.msra.mxu0 %v965
    %1009 = vmatprep.subr.mxu0 %v969
    %1010 = vmatpush1.msra.mxu0 %v968
    %1011 = vmatprep.subr.mxu0 %v972
    %1012 = vmatpush1.msra.mxu0 %v971
    %1013 = vmatprep.subr.mxu0 %v975
    %1014 = vmatpush1.msra.mxu0 %v974
    %1015 = vmatprep.subr.mxu0 %v978
    %1016 = vmatpush1.msra.mxu0 %v977
    %1017 = vmatprep.subr.mxu0 %v981
    %1018 = vmatpush1.msra.mxu0 %v980
    %1019 = vmatprep.subr.mxu0 %v984
    %1020 = vmatpush1.msra.mxu0 %v983
    %1021 = vmatprep.subr.mxu0 %v987
    %1022 = vmatpush1.msra.mxu0 %v986
    %1023 = vmatprep.subr.mxu0 %v990
    %1024 = vmatpush1.msra.mxu0 %v989
    %1025 = vmatprep.subr.mxu0 %v993
    %1026 = vmatpush1.msra.mxu0 %v992
    %1027 = vmatprep.subr.mxu0 0.0
    %1028 = vmatpush1.msra.mxu0 0.0
    %1029 = vmatprep.subr.mxu0 0.0
    %1030 = vmatpush1.msra.mxu0 0.0
    %1031 = vmatprep.subr.mxu0 0.0
    %1032 = vmatpush1.msra.mxu0 0.0
    %1033 = vmatprep.subr.mxu0 0.0
    %1034 = vmatpush1.msra.mxu0 0.0
    %1035 = vmatprep.subr.mxu0 0.0
    %1036 = vmatpush1.msra.mxu0 0.0
    %1037 = vmatprep.subr.mxu0 0.0
    %1038 = vmatpush1.msra.mxu0 0.0
    %1039 = vmatprep.subr.mxu0 0.0
    %1040 = vmatpush1.msra.mxu0 0.0
    %1041 = vmatprep.subr.mxu0 0.0
    %1042 = vmatpush1.msra.mxu0 0.0
    %1043 = vmatprep.subr.mxu0 0.0
    %1044 = vmatpush1.msra.mxu0 0.0
    %1045 = vmatprep.subr.mxu0 0.0
    %1046 = vmatpush1.msra.mxu0 0.0
    %1047 = vmatprep.subr.mxu0 0.0
    %1048 = vmatpush1.msra.mxu0 0.0
    %1049 = vmatprep.subr.mxu0 0.0
    %1050 = vmatpush1.msra.mxu0 0.0
    %1051 = vmatprep.subr.mxu0 0.0
    %1052 = vmatpush1.msra.mxu0 0.0
    %1053 = vmatprep.subr.mxu0 0.0
    %1054 = vmatpush1.msra.mxu0 0.0
    %1055 = vmatprep.subr.mxu0 0.0
    %1056 = vmatpush1.msra.mxu0 0.0
    %1057 = vmatprep.subr.mxu0 0.0
    %1058 = vmatpush1.msra.mxu0 0.0
    %1059 = vmatprep.mubr.f32.mxu0 0.0
    %1060 = vmatmul.mubr.f32.gmra.mrb[0].mxu0 %v940
    %v1061 = vpop.f32.mrb[0].mxu0
    %v1062 = vadd.f32 0.0, %v1061
    %v1063 = vpop.f32.mrb[0].mxu0
    %v1064 = vadd.f32 0.0, %v1063
    %1065 = vdwg.mxu0
    %1066 = vmatprep.subr.mxu0 0.0
    %1067 = vmatpush1.msra.mxu0 %v949
    %1068 = vmatprep.subr.mxu0 0.0
    %1069 = vmatpush1.msra.mxu0 %v952
    %1070 = vmatprep.subr.mxu0 0.0
    %1071 = vmatpush1.msra.mxu0 %v955
    %1072 = vmatprep.subr.mxu0 0.0
    %1073 = vmatpush1.msra.mxu0 %v958
    %1074 = vmatprep.subr.mxu0 0.0
    %1075 = vmatpush1.msra.mxu0 %v961
    %1076 = vmatprep.subr.mxu0 0.0
    %1077 = vmatpush1.msra.mxu0 %v964
    %1078 = vmatprep.subr.mxu0 0.0
    %1079 = vmatpush1.msra.mxu0 %v967
    %1080 = vmatprep.subr.mxu0 0.0
    %1081 = vmatpush1.msra.mxu0 %v970
    %1082 = vmatprep.subr.mxu0 0.0
    %1083 = vmatpush1.msra.mxu0 %v973
    %1084 = vmatprep.subr.mxu0 0.0
    %1085 = vmatpush1.msra.mxu0 %v976
    %1086 = vmatprep.subr.mxu0 0.0
    %1087 = vmatpush1.msra.mxu0 %v979
    %1088 = vmatprep.subr.mxu0 0.0
    %1089 = vmatpush1.msra.mxu0 %v982
    %1090 = vmatprep.subr.mxu0 0.0
    %1091 = vmatpush1.msra.mxu0 %v985
    %1092 = vmatprep.subr.mxu0 0.0
    %1093 = vmatpush1.msra.mxu0 %v988
    %1094 = vmatprep.subr.mxu0 0.0
    %1095 = vmatpush1.msra.mxu0 %v991
    %1096 = vmatprep.subr.mxu0 0.0
    %1097 = vmatpush1.msra.mxu0 %v994
    %1098 = vmatprep.subr.mxu0 0.0
    %1099 = vmatpush1.msra.mxu0 0.0
    %1100 = vmatprep.subr.mxu0 0.0
    %1101 = vmatpush1.msra.mxu0 0.0
    %1102 = vmatprep.subr.mxu0 0.0
    %1103 = vmatpush1.msra.mxu0 0.0
    %1104 = vmatprep.subr.mxu0 0.0
    %1105 = vmatpush1.msra.mxu0 0.0
    %1106 = vmatprep.subr.mxu0 0.0
    %1107 = vmatpush1.msra.mxu0 0.0
    %1108 = vmatprep.subr.mxu0 0.0
    %1109 = vmatpush1.msra.mxu0 0.0
    %1110 = vmatprep.subr.mxu0 0.0
    %1111 = vmatpush1.msra.mxu0 0.0
    %1112 = vmatprep.subr.mxu0 0.0
    %1113 = vmatpush1.msra.mxu0 0.0
    %1114 = vmatprep.subr.mxu0 0.0
    %1115 = vmatpush1.msra.mxu0 0.0
    %1116 = vmatprep.subr.mxu0 0.0
    %1117 = vmatpush1.msra.mxu0 0.0
    %1118 = vmatprep.subr.mxu0 0.0
    %1119 = vmatpush1.msra.mxu0 0.0
    %1120 = vmatprep.subr.mxu0 0.0
    %1121 = vmatpush1.msra.mxu0 0.0
    %1122 = vmatprep.subr.mxu0 0.0
    %1123 = vmatpush1.msra.mxu0 0.0
    %1124 = vmatprep.subr.mxu0 0.0
    %1125 = vmatpush1.msra.mxu0 0.0
    %1126 = vmatprep.subr.mxu0 0.0
    %1127 = vmatpush1.msra.mxu0 0.0
    %1128 = vmatprep.subr.mxu0 0.0
    %1129 = vmatpush1.msra.mxu0 0.0
    %1130 = vmatprep.mubr.f32.mxu0 0.0
    %1131 = vmatmul.mubr.f32.gmra.mrb[0].mxu0 %v940
    %v1132 = vpop.f32.mrb[0].mxu0
    %v1133 = vadd.f32 0.0, %v1132
    %v1134 = vpop.f32.mrb[0].mxu0
    %1135 = vdwg.mxu0
    %v1136 = vadd.f32 %v944, %v1062
    %v1137 = vxor.u32 %v1136, 2147483648
    %v1138 = vmul.f32 %v1137, 1.442695
    %v1139 = vpow.pop %v1138
    %v1140 = vadd.f32 %v1139, 1.0
    %v1141 = vrcp.pop %v1140
    %v1142 = vmul.f32 1.0, %v1141
    %v1143 = vadd.f32 %v945, %v1064
    %v1144 = vxor.u32 %v1143, 2147483648
    %v1145 = vmul.f32 %v1144, 1.442695
    %v1146 = vpow.pop %v1145
    %v1147 = vadd.f32 %v1146, 1.0
    %v1148 = vrcp.pop %v1147
    %v1149 = vmul.f32 1.0, %v1148
    %v1150 = vld [vmem:[%s2] sm:$0x1]
    %v1152 = vlaneseq
    %v1153 = vshrl.u32 %v1152, 7
    %v1154 = vsub.s32 0, %v1153
    %v1155 = vrot.slane %v1150, %v1154
    %v1157 = vadd.f32 %v1133, %v1155
    %v1158 = vmul.f32 %v1142, %v1157
    %v1159 = vadd.f32 %v946, %v1158
    %v1160 = vtanh.pop %v1159
    %v1161 = vsub.f32 1.0, %v1149
    %v1162 = vmul.f32 %v1161, %v1160
    %v1163 = vmul.f32 %v1149, %v940
    %v1164 = vadd.f32 %v1162, %v1163
    %s1165 = scalar_lea.vmem [#allocation8], 32
    %1166 = vst [vmem:[%s1165] sm:$0xff] %v1164
    %s1167 = scalar_lea.vmem [#allocation3], 120
    %v1168 = vld [vmem:[%s1167] sm:$0xff]
    %v1169 = vld [vmem:[%s1167 + $0x8] sm:$0xff]
    %v1170 = vld [vmem:[%s1167 + $0x10] sm:$0xff]
    %v1171 = vld [vmem:[#allocation6] sm:$0xff]
    %v1172 = vld [vmem:[#allocation6 + $0x8] sm:$0xff]
    %v1173 = vld [vmem:[#allocation6 + $0x10] sm:$0xff]
    %v1174 = vld [vmem:[#allocation6 + $0x18] sm:$0xff]
    %v1175 = vld [vmem:[#allocation6 + $0x20] sm:$0xff]
    %v1176 = vld [vmem:[#allocation6 + $0x28] sm:$0xff]
    %v1177 = vld [vmem:[#allocation6 + $0x30] sm:$0xff]
    %v1178 = vld [vmem:[#allocation6 + $0x38] sm:$0xff]
    %v1179 = vld [vmem:[#allocation6 + $0x40] sm:$0xff]
    %v1180 = vld [vmem:[#allocation6 + $0x48] sm:$0xff]
    %v1181 = vld [vmem:[#allocation6 + $0x50] sm:$0xff]
    %v1182 = vld [vmem:[#allocation6 + $0x58] sm:$0xff]
    %v1183 = vld [vmem:[#allocation6 + $0x60] sm:$0xff]
    %v1184 = vld [vmem:[#allocation6 + $0x68] sm:$0xff]
    %v1185 = vld [vmem:[#allocation6 + $0x70] sm:$0xff]
    %v1186 = vld [vmem:[#allocation6 + $0x78] sm:$0xff]
    %v1187 = vld [vmem:[#allocation6 + $0x80] sm:$0xff]
    %v1188 = vld [vmem:[#allocation6 + $0x88] sm:$0xff]
    %v1189 = vld [vmem:[#allocation6 + $0x90] sm:$0xff]
    %v1190 = vld [vmem:[#allocation6 + $0x98] sm:$0xff]
    %v1191 = vld [vmem:[#allocation6 + $0xa0] sm:$0xff]
    %v1192 = vld [vmem:[#allocation6 + $0xa8] sm:$0xff]
    %v1193 = vld [vmem:[#allocation6 + $0xb0] sm:$0xff]
    %v1194 = vld [vmem:[#allocation6 + $0xb8] sm:$0xff]
    %v1195 = vld [vmem:[#allocation6 + $0xc0] sm:$0xff]
    %v1196 = vld [vmem:[#allocation6 + $0xc8] sm:$0xff]
    %v1197 = vld [vmem:[#allocation6 + $0xd0] sm:$0xff]
    %v1198 = vld [vmem:[#allocation6 + $0xd8] sm:$0xff]
    %v1199 = vld [vmem:[#allocation6 + $0xe0] sm:$0xff]
    %v1200 = vld [vmem:[#allocation6 + $0xe8] sm:$0xff]
    %v1201 = vld [vmem:[#allocation6 + $0xf0] sm:$0xff]
    %v1202 = vld [vmem:[#allocation6 + $0xf8] sm:$0xff]
    %v1203 = vld [vmem:[#allocation6 + $0x100] sm:$0xff]
    %v1204 = vld [vmem:[#allocation6 + $0x108] sm:$0xff]
    %v1205 = vld [vmem:[#allocation6 + $0x110] sm:$0xff]
    %v1206 = vld [vmem:[#allocation6 + $0x118] sm:$0xff]
    %v1207 = vld [vmem:[#allocation6 + $0x120] sm:$0xff]
    %v1208 = vld [vmem:[#allocation6 + $0x128] sm:$0xff]
    %v1209 = vld [vmem:[#allocation6 + $0x130] sm:$0xff]
    %v1210 = vld [vmem:[#allocation6 + $0x138] sm:$0xff]
    %v1211 = vld [vmem:[#allocation6 + $0x140] sm:$0xff]
    %v1212 = vld [vmem:[#allocation6 + $0x148] sm:$0xff]
    %v1213 = vld [vmem:[#allocation6 + $0x150] sm:$0xff]
    %v1214 = vld [vmem:[#allocation6 + $0x158] sm:$0xff]
    %v1215 = vld [vmem:[#allocation6 + $0x160] sm:$0xff]
    %v1216 = vld [vmem:[#allocation6 + $0x168] sm:$0xff]
    %v1217 = vld [vmem:[#allocation6 + $0x170] sm:$0xff]
    %v1218 = vld [vmem:[#allocation6 + $0x178] sm:$0xff]
    %1219 = vmatprep.subr.mxu0 %v1172
    %1220 = vmatpush1.msra.mxu0 %v1171
    %1221 = vmatprep.subr.mxu0 %v1175
    %1222 = vmatpush1.msra.mxu0 %v1174
    %1223 = vmatprep.subr.mxu0 %v1178
    %1224 = vmatpush1.msra.mxu0 %v1177
    %1225 = vmatprep.subr.mxu0 %v1181
    %1226 = vmatpush1.msra.mxu0 %v1180
    %1227 = vmatprep.subr.mxu0 %v1184
    %1228 = vmatpush1.msra.mxu0 %v1183
    %1229 = vmatprep.subr.mxu0 %v1187
    %1230 = vmatpush1.msra.mxu0 %v1186
    %1231 = vmatprep.subr.mxu0 %v1190
    %1232 = vmatpush1.msra.mxu0 %v1189
    %1233 = vmatprep.subr.mxu0 %v1193
    %1234 = vmatpush1.msra.mxu0 %v1192
    %1235 = vmatprep.subr.mxu0 %v1196
    %1236 = vmatpush1.msra.mxu0 %v1195
    %1237 = vmatprep.subr.mxu0 %v1199
    %1238 = vmatpush1.msra.mxu0 %v1198
    %1239 = vmatprep.subr.mxu0 %v1202
    %1240 = vmatpush1.msra.mxu0 %v1201
    %1241 = vmatprep.subr.mxu0 %v1205
    %1242 = vmatpush1.msra.mxu0 %v1204
    %1243 = vmatprep.subr.mxu0 %v1208
    %1244 = vmatpush1.msra.mxu0 %v1207
    %1245 = vmatprep.subr.mxu0 %v1211
    %1246 = vmatpush1.msra.mxu0 %v1210
    %1247 = vmatprep.subr.mxu0 %v1214
    %1248 = vmatpush1.msra.mxu0 %v1213
    %1249 = vmatprep.subr.mxu0 %v1217
    %1250 = vmatpush1.msra.mxu0 %v1216
    %1251 = vmatprep.subr.mxu0 0.0
    %1252 = vmatpush1.msra.mxu0 0.0
    %1253 = vmatprep.subr.mxu0 0.0
    %1254 = vmatpush1.msra.mxu0 0.0
    %1255 = vmatprep.subr.mxu0 0.0
    %1256 = vmatpush1.msra.mxu0 0.0
    %1257 = vmatprep.subr.mxu0 0.0
    %1258 = vmatpush1.msra.mxu0 0.0
    %1259 = vmatprep.subr.mxu0 0.0
    %1260 = vmatpush1.msra.mxu0 0.0
    %1261 = vmatprep.subr.mxu0 0.0
    %1262 = vmatpush1.msra.mxu0 0.0
    %1263 = vmatprep.subr.mxu0 0.0
    %1264 = vmatpush1.msra.mxu0 0.0
    %1265 = vmatprep.subr.mxu0 0.0
    %1266 = vmatpush1.msra.mxu0 0.0
    %1267 = vmatprep.subr.mxu0 0.0
    %1268 = vmatpush1.msra.mxu0 0.0
    %1269 = vmatprep.subr.mxu0 0.0
    %1270 = vmatpush1.msra.mxu0 0.0
    %1271 = vmatprep.subr.mxu0 0.0
    %1272 = vmatpush1.msra.mxu0 0.0
    %1273 = vmatprep.subr.mxu0 0.0
    %1274 = vmatpush1.msra.mxu0 0.0
    %1275 = vmatprep.subr.mxu0 0.0
    %1276 = vmatpush1.msra.mxu0 0.0
    %1277 = vmatprep.subr.mxu0 0.0
    %1278 = vmatpush1.msra.mxu0 0.0
    %1279 = vmatprep.subr.mxu0 0.0
    %1280 = vmatpush1.msra.mxu0 0.0
    %1281 = vmatprep.subr.mxu0 0.0
    %1282 = vmatpush1.msra.mxu0 0.0
    %1283 = vmatprep.mubr.f32.mxu0 0.0
    %1284 = vmatmul.mubr.f32.gmra.mrb[0].mxu0 %v1164
    %v1285 = vpop.f32.mrb[0].mxu0
    %v1286 = vadd.f32 0.0, %v1285
    %v1287 = vpop.f32.mrb[0].mxu0
    %v1288 = vadd.f32 0.0, %v1287
    %1289 = vdwg.mxu0
    %1290 = vmatprep.subr.mxu0 0.0
    %1291 = vmatpush1.msra.mxu0 %v1173
    %1292 = vmatprep.subr.mxu0 0.0
    %1293 = vmatpush1.msra.mxu0 %v1176
    %1294 = vmatprep.subr.mxu0 0.0
    %1295 = vmatpush1.msra.mxu0 %v1179
    %1296 = vmatprep.subr.mxu0 0.0
    %1297 = vmatpush1.msra.mxu0 %v1182
    %1298 = vmatprep.subr.mxu0 0.0
    %1299 = vmatpush1.msra.mxu0 %v1185
    %1300 = vmatprep.subr.mxu0 0.0
    %1301 = vmatpush1.msra.mxu0 %v1188
    %1302 = vmatprep.subr.mxu0 0.0
    %1303 = vmatpush1.msra.mxu0 %v1191
    %1304 = vmatprep.subr.mxu0 0.0
    %1305 = vmatpush1.msra.mxu0 %v1194
    %1306 = vmatprep.subr.mxu0 0.0
    %1307 = vmatpush1.msra.mxu0 %v1197
    %1308 = vmatprep.subr.mxu0 0.0
    %1309 = vmatpush1.msra.mxu0 %v1200
    %1310 = vmatprep.subr.mxu0 0.0
    %1311 = vmatpush1.msra.mxu0 %v1203
    %1312 = vmatprep.subr.mxu0 0.0
    %1313 = vmatpush1.msra.mxu0 %v1206
    %1314 = vmatprep.subr.mxu0 0.0
    %1315 = vmatpush1.msra.mxu0 %v1209
    %1316 = vmatprep.subr.mxu0 0.0
    %1317 = vmatpush1.msra.mxu0 %v1212
    %1318 = vmatprep.subr.mxu0 0.0
    %1319 = vmatpush1.msra.mxu0 %v1215
    %1320 = vmatprep.subr.mxu0 0.0
    %1321 = vmatpush1.msra.mxu0 %v1218
    %1322 = vmatprep.subr.mxu0 0.0
    %1323 = vmatpush1.msra.mxu0 0.0
    %1324 = vmatprep.subr.mxu0 0.0
    %1325 = vmatpush1.msra.mxu0 0.0
    %1326 = vmatprep.subr.mxu0 0.0
    %1327 = vmatpush1.msra.mxu0 0.0
    %1328 = vmatprep.subr.mxu0 0.0
    %1329 = vmatpush1.msra.mxu0 0.0
    %1330 = vmatprep.subr.mxu0 0.0
    %1331 = vmatpush1.msra.mxu0 0.0
    %1332 = vmatprep.subr.mxu0 0.0
    %1333 = vmatpush1.msra.mxu0 0.0
    %1334 = vmatprep.subr.mxu0 0.0
    %1335 = vmatpush1.msra.mxu0 0.0
    %1336 = vmatprep.subr.mxu0 0.0
    %1337 = vmatpush1.msra.mxu0 0.0
    %1338 = vmatprep.subr.mxu0 0.0
    %1339 = vmatpush1.msra.mxu0 0.0
    %1340 = vmatprep.subr.mxu0 0.0
    %1341 = vmatpush1.msra.mxu0 0.0
    %1342 = vmatprep.subr.mxu0 0.0
    %1343 = vmatpush1.msra.mxu0 0.0
    %1344 = vmatprep.subr.mxu0 0.0
    %1345 = vmatpush1.msra.mxu0 0.0
    %1346 = vmatprep.subr.mxu0 0.0
    %1347 = vmatpush1.msra.mxu0 0.0
    %1348 = vmatprep.subr.mxu0 0.0
    %1349 = vmatpush1.msra.mxu0 0.0
    %1350 = vmatprep.subr.mxu0 0.0
    %1351 = vmatpush1.msra.mxu0 0.0
    %1352 = vmatprep.subr.mxu0 0.0
    %1353 = vmatpush1.msra.mxu0 0.0
    %1354 = vmatprep.mubr.f32.mxu0 0.0
    %1355 = vmatmul.mubr.f32.gmra.mrb[0].mxu0 %v1164
    %v1356 = vpop.f32.mrb[0].mxu0
    %v1357 = vadd.f32 0.0, %v1356
    %v1358 = vpop.f32.mrb[0].mxu0
    %1359 = vdwg.mxu0
    %v1360 = vadd.f32 %v1168, %v1286
    %v1361 = vxor.u32 %v1360, 2147483648
    %v1362 = vmul.f32 %v1361, 1.442695
    %v1363 = vpow.pop %v1362
    %v1364 = vadd.f32 %v1363, 1.0
    %v1365 = vrcp.pop %v1364
    %v1366 = vmul.f32 1.0, %v1365
    %v1367 = vadd.f32 %v1169, %v1288
    %v1368 = vxor.u32 %v1367, 2147483648
    %v1369 = vmul.f32 %v1368, 1.442695
    %v1370 = vpow.pop %v1369
    %v1371 = vadd.f32 %v1370, 1.0
    %v1372 = vrcp.pop %v1371
    %v1373 = vmul.f32 1.0, %v1372
    %v1374 = vld [vmem:[%s2] sm:$0x1]
    %v1376 = vlaneseq
    %v1377 = vshrl.u32 %v1376, 7
    %v1378 = vsub.s32 0, %v1377
    %v1379 = vrot.slane %v1374, %v1378
    %v1381 = vadd.f32 %v1357, %v1379
    %v1382 = vmul.f32 %v1366, %v1381
    %v1383 = vadd.f32 %v1170, %v1382
    %v1384 = vtanh.pop %v1383
    %v1385 = vsub.f32 1.0, %v1373
    %v1386 = vmul.f32 %v1385, %v1384
    %v1387 = vmul.f32 %v1373, %v1164
    %v1388 = vadd.f32 %v1386, %v1387
    %s1389 = scalar_lea.vmem [#allocation8], 40
    %1390 = vst [vmem:[%s1389] sm:$0xff] %v1388
    %s1391 = scalar_lea.vmem [#allocation3], 144
    %v1392 = vld [vmem:[%s1391] sm:$0xff]
    %v1393 = vld [vmem:[%s1391 + $0x8] sm:$0xff]
    %v1394 = vld [vmem:[%s1391 + $0x10] sm:$0xff]
    %v1395 = vld [vmem:[#allocation6] sm:$0xff]
    %v1396 = vld [vmem:[#allocation6 + $0x8] sm:$0xff]
    %v1397 = vld [vmem:[#allocation6 + $0x10] sm:$0xff]
    %v1398 = vld [vmem:[#allocation6 + $0x18] sm:$0xff]
    %v1399 = vld [vmem:[#allocation6 + $0x20] sm:$0xff]
    %v1400 = vld [vmem:[#allocation6 + $0x28] sm:$0xff]
    %v1401 = vld [vmem:[#allocation6 + $0x30] sm:$0xff]
    %v1402 = vld [vmem:[#allocation6 + $0x38] sm:$0xff]
    %v1403 = vld [vmem:[#allocation6 + $0x40] sm:$0xff]
    %v1404 = vld [vmem:[#allocation6 + $0x48] sm:$0xff]
    %v1405 = vld [vmem:[#allocation6 + $0x50] sm:$0xff]
    %v1406 = vld [vmem:[#allocation6 + $0x58] sm:$0xff]
    %v1407 = vld [vmem:[#allocation6 + $0x60] sm:$0xff]
    %v1408 = vld [vmem:[#allocation6 + $0x68] sm:$0xff]
    %v1409 = vld [vmem:[#allocation6 + $0x70] sm:$0xff]
    %v1410 = vld [vmem:[#allocation6 + $0x78] sm:$0xff]
    %v1411 = vld [vmem:[#allocation6 + $0x80] sm:$0xff]
    %v1412 = vld [vmem:[#allocation6 + $0x88] sm:$0xff]
    %v1413 = vld [vmem:[#allocation6 + $0x90] sm:$0xff]
    %v1414 = vld [vmem:[#allocation6 + $0x98] sm:$0xff]
    %v1415 = vld [vmem:[#allocation6 + $0xa0] sm:$0xff]
    %v1416 = vld [vmem:[#allocation6 + $0xa8] sm:$0xff]
    %v1417 = vld [vmem:[#allocation6 + $0xb0] sm:$0xff]
    %v1418 = vld [vmem:[#allocation6 + $0xb8] sm:$0xff]
    %v1419 = vld [vmem:[#allocation6 + $0xc0] sm:$0xff]
    %v1420 = vld [vmem:[#allocation6 + $0xc8] sm:$0xff]
    %v1421 = vld [vmem:[#allocation6 + $0xd0] sm:$0xff]
    %v1422 = vld [vmem:[#allocation6 + $0xd8] sm:$0xff]
    %v1423 = vld [vmem:[#allocation6 + $0xe0] sm:$0xff]
    %v1424 = vld [vmem:[#allocation6 + $0xe8] sm:$0xff]
    %v1425 = vld [vmem:[#allocation6 + $0xf0] sm:$0xff]
    %v1426 = vld [vmem:[#allocation6 + $0xf8] sm:$0xff]
    %v1427 = vld [vmem:[#allocation6 + $0x100] sm:$0xff]
    %v1428 = vld [vmem:[#allocation6 + $0x108] sm:$0xff]
    %v1429 = vld [vmem:[#allocation6 + $0x110] sm:$0xff]
    %v1430 = vld [vmem:[#allocation6 + $0x118] sm:$0xff]
    %v1431 = vld [vmem:[#allocation6 + $0x120] sm:$0xff]
    %v1432 = vld [vmem:[#allocation6 + $0x128] sm:$0xff]
    %v1433 = vld [vmem:[#allocation6 + $0x130] sm:$0xff]
    %v1434 = vld [vmem:[#allocation6 + $0x138] sm:$0xff]
    %v1435 = vld [vmem:[#allocation6 + $0x140] sm:$0xff]
    %v1436 = vld [vmem:[#allocation6 + $0x148] sm:$0xff]
    %v1437 = vld [vmem:[#allocation6 + $0x150] sm:$0xff]
    %v1438 = vld [vmem:[#allocation6 + $0x158] sm:$0xff]
    %v1439 = vld [vmem:[#allocation6 + $0x160] sm:$0xff]
    %v1440 = vld [vmem:[#allocation6 + $0x168] sm:$0xff]
    %v1441 = vld [vmem:[#allocation6 + $0x170] sm:$0xff]
    %v1442 = vld [vmem:[#allocation6 + $0x178] sm:$0xff]
    %1443 = vmatprep.subr.mxu0 %v1396
    %1444 = vmatpush1.msra.mxu0 %v1395
    %1445 = vmatprep.subr.mxu0 %v1399
    %1446 = vmatpush1.msra.mxu0 %v1398
    %1447 = vmatprep.subr.mxu0 %v1402
    %1448 = vmatpush1.msra.mxu0 %v1401
    %1449 = vmatprep.subr.mxu0 %v1405
    %1450 = vmatpush1.msra.mxu0 %v1404
    %1451 = vmatprep.subr.mxu0 %v1408
    %1452 = vmatpush1.msra.mxu0 %v1407
    %1453 = vmatprep.subr.mxu0 %v1411
    %1454 = vmatpush1.msra.mxu0 %v1410
    %1455 = vmatprep.subr.mxu0 %v1414
    %1456 = vmatpush1.msra.mxu0 %v1413
    %1457 = vmatprep.subr.mxu0 %v1417
    %1458 = vmatpush1.msra.mxu0 %v1416
    %1459 = vmatprep.subr.mxu0 %v1420
    %1460 = vmatpush1.msra.mxu0 %v1419
    %1461 = vmatprep.subr.mxu0 %v1423
    %1462 = vmatpush1.msra.mxu0 %v1422
    %1463 = vmatprep.subr.mxu0 %v1426
    %1464 = vmatpush1.msra.mxu0 %v1425
    %1465 = vmatprep.subr.mxu0 %v1429
    %1466 = vmatpush1.msra.mxu0 %v1428
    %1467 = vmatprep.subr.mxu0 %v1432
    %1468 = vmatpush1.msra.mxu0 %v1431
    %1469 = vmatprep.subr.mxu0 %v1435
    %1470 = vmatpush1.msra.mxu0 %v1434
    %1471 = vmatprep.subr.mxu0 %v1438
    %1472 = vmatpush1.msra.mxu0 %v1437
    %1473 = vmatprep.subr.mxu0 %v1441
    %1474 = vmatpush1.msra.mxu0 %v1440
    %1475 = vmatprep.subr.mxu0 0.0
    %1476 = vmatpush1.msra.mxu0 0.0
    %1477 = vmatprep.subr.mxu0 0.0
    %1478 = vmatpush1.msra.mxu0 0.0
    %1479 = vmatprep.subr.mxu0 0.0
    %1480 = vmatpush1.msra.mxu0 0.0
    %1481 = vmatprep.subr.mxu0 0.0
    %1482 = vmatpush1.msra.mxu0 0.0
    %1483 = vmatprep.subr.mxu0 0.0
    %1484 = vmatpush1.msra.mxu0 0.0
    %1485 = vmatprep.subr.mxu0 0.0
    %1486 = vmatpush1.msra.mxu0 0.0
    %1487 = vmatprep.subr.mxu0 0.0
    %1488 = vmatpush1.msra.mxu0 0.0
    %1489 = vmatprep.subr.mxu0 0.0
    %1490 = vmatpush1.msra.mxu0 0.0
    %1491 = vmatprep.subr.mxu0 0.0
    %1492 = vmatpush1.msra.mxu0 0.0
    %1493 = vmatprep.subr.mxu0 0.0
    %1494 = vmatpush1.msra.mxu0 0.0
    %1495 = vmatprep.subr.mxu0 0.0
    %1496 = vmatpush1.msra.mxu0 0.0
    %1497 = vmatprep.subr.mxu0 0.0
    %1498 = vmatpush1.msra.mxu0 0.0
    %1499 = vmatprep.subr.mxu0 0.0
    %1500 = vmatpush1.msra.mxu0 0.0
    %1501 = vmatprep.subr.mxu0 0.0
    %1502 = vmatpush1.msra.mxu0 0.0
    %1503 = vmatprep.subr.mxu0 0.0
    %1504 = vmatpush1.msra.mxu0 0.0
    %1505 = vmatprep.subr.mxu0 0.0
    %1506 = vmatpush1.msra.mxu0 0.0
    %1507 = vmatprep.mubr.f32.mxu0 0.0
    %1508 = vmatmul.mubr.f32.gmra.mrb[0].mxu0 %v1388
    %v1509 = vpop.f32.mrb[0].mxu0
    %v1510 = vadd.f32 0.0, %v1509
    %v1511 = vpop.f32.mrb[0].mxu0
    %v1512 = vadd.f32 0.0, %v1511
    %1513 = vdwg.mxu0
    %1514 = vmatprep.subr.mxu0 0.0
    %1515 = vmatpush1.msra.mxu0 %v1397
    %1516 = vmatprep.subr.mxu0 0.0
    %1517 = vmatpush1.msra.mxu0 %v1400
    %1518 = vmatprep.subr.mxu0 0.0
    %1519 = vmatpush1.msra.mxu0 %v1403
    %1520 = vmatprep.subr.mxu0 0.0
    %1521 = vmatpush1.msra.mxu0 %v1406
    %1522 = vmatprep.subr.mxu0 0.0
    %1523 = vmatpush1.msra.mxu0 %v1409
    %1524 = vmatprep.subr.mxu0 0.0
    %1525 = vmatpush1.msra.mxu0 %v1412
    %1526 = vmatprep.subr.mxu0 0.0
    %1527 = vmatpush1.msra.mxu0 %v1415
    %1528 = vmatprep.subr.mxu0 0.0
    %1529 = vmatpush1.msra.mxu0 %v1418
    %1530 = vmatprep.subr.mxu0 0.0
    %1531 = vmatpush1.msra.mxu0 %v1421
    %1532 = vmatprep.subr.mxu0 0.0
    %1533 = vmatpush1.msra.mxu0 %v1424
    %1534 = vmatprep.subr.mxu0 0.0
    %1535 = vmatpush1.msra.mxu0 %v1427
    %1536 = vmatprep.subr.mxu0 0.0
    %1537 = vmatpush1.msra.mxu0 %v1430
    %1538 = vmatprep.subr.mxu0 0.0
    %1539 = vmatpush1.msra.mxu0 %v1433
    %1540 = vmatprep.subr.mxu0 0.0
    %1541 = vmatpush1.msra.mxu0 %v1436
    %1542 = vmatprep.subr.mxu0 0.0
    %1543 = vmatpush1.msra.mxu0 %v1439
    %1544 = vmatprep.subr.mxu0 0.0
    %1545 = vmatpush1.msra.mxu0 %v1442
    %1546 = vmatprep.subr.mxu0 0.0
    %1547 = vmatpush1.msra.mxu0 0.0
    %1548 = vmatprep.subr.mxu0 0.0
    %1549 = vmatpush1.msra.mxu0 0.0
    %1550 = vmatprep.subr.mxu0 0.0
    %1551 = vmatpush1.msra.mxu0 0.0
    %1552 = vmatprep.subr.mxu0 0.0
    %1553 = vmatpush1.msra.mxu0 0.0
    %1554 = vmatprep.subr.mxu0 0.0
    %1555 = vmatpush1.msra.mxu0 0.0
    %1556 = vmatprep.subr.mxu0 0.0
    %1557 = vmatpush1.msra.mxu0 0.0
    %1558 = vmatprep.subr.mxu0 0.0
    %1559 = vmatpush1.msra.mxu0 0.0
    %1560 = vmatprep.subr.mxu0 0.0
    %1561 = vmatpush1.msra.mxu0 0.0
    %1562 = vmatprep.subr.mxu0 0.0
    %1563 = vmatpush1.msra.mxu0 0.0
    %1564 = vmatprep.subr.mxu0 0.0
    %1565 = vmatpush1.msra.mxu0 0.0
    %1566 = vmatprep.subr.mxu0 0.0
    %1567 = vmatpush1.msra.mxu0 0.0
    %1568 = vmatprep.subr.mxu0 0.0
    %1569 = vmatpush1.msra.mxu0 0.0
    %1570 = vmatprep.subr.mxu0 0.0
    %1571 = vmatpush1.msra.mxu0 0.0
    %1572 = vmatprep.subr.mxu0 0.0
    %1573 = vmatpush1.msra.mxu0 0.0
    %1574 = vmatprep.subr.mxu0 0.0
    %1575 = vmatpush1.msra.mxu0 0.0
    %1576 = vmatprep.subr.mxu0 0.0
    %1577 = vmatpush1.msra.mxu0 0.0
    %1578 = vmatprep.mubr.f32.mxu0 0.0
    %1579 = vmatmul.mubr.f32.gmra.mrb[0].mxu0 %v1388
    %v1580 = vpop.f32.mrb[0].mxu0
    %v1581 = vadd.f32 0.0, %v1580
    %v1582 = vpop.f32.mrb[0].mxu0
    %1583 = vdwg.mxu0
    %v1584 = vadd.f32 %v1392, %v1510
    %v1585 = vxor.u32 %v1584, 2147483648
    %v1586 = vmul.f32 %v1585, 1.442695
    %v1587 = vpow.pop %v1586
    %v1588 = vadd.f32 %v1587, 1.0
    %v1589 = vrcp.pop %v1588
    %v1590 = vmul.f32 1.0, %v1589
    %v1591 = vadd.f32 %v1393, %v1512
    %v1592 = vxor.u32 %v1591, 2147483648
    %v1593 = vmul.f32 %v1592, 1.442695
    %v1594 = vpow.pop %v1593
    %v1595 = vadd.f32 %v1594, 1.0
    %v1596 = vrcp.pop %v1595
    %v1597 = vmul.f32 1.0, %v1596
    %v1598 = vld [vmem:[%s2] sm:$0x1]
    %v1600 = vlaneseq
    %v1601 = vshrl.u32 %v1600, 7
    %v1602 = vsub.s32 0, %v1601
    %v1603 = vrot.slane %v1598, %v1602
    %v1605 = vadd.f32 %v1581, %v1603
    %v1606 = vmul.f32 %v1590, %v1605
    %v1607 = vadd.f32 %v1394, %v1606
    %v1608 = vtanh.pop %v1607
    %v1609 = vsub.f32 1.0, %v1597
    %v1610 = vmul.f32 %v1609, %v1608
    %v1611 = vmul.f32 %v1597, %v1388
    %v1612 = vadd.f32 %v1610, %v1611
    %s1613 = scalar_lea.vmem [#allocation8], 48
    %1614 = vst [vmem:[%s1613] sm:$0xff] %v1612
    %s1615 = scalar_lea.vmem [#allocation3], 168
    %v1616 = vld [vmem:[%s1615] sm:$0xff]
    %v1617 = vld [vmem:[%s1615 + $0x8] sm:$0xff]
    %v1618 = vld [vmem:[%s1615 + $0x10] sm:$0xff]
    %v1619 = vld [vmem:[#allocation6] sm:$0xff]
    %v1620 = vld [vmem:[#allocation6 + $0x8] sm:$0xff]
    %v1621 = vld [vmem:[#allocation6 + $0x10] sm:$0xff]
    %v1622 = vld [vmem:[#allocation6 + $0x18] sm:$0xff]
    %v1623 = vld [vmem:[#allocation6 + $0x20] sm:$0xff]
    %v1624 = vld [vmem:[#allocation6 + $0x28] sm:$0xff]
    %v1625 = vld [vmem:[#allocation6 + $0x30] sm:$0xff]
    %v1626 = vld [vmem:[#allocation6 + $0x38] sm:$0xff]
    %v1627 = vld [vmem:[#allocation6 + $0x40] sm:$0xff]
    %v1628 = vld [vmem:[#allocation6 + $0x48] sm:$0xff]
    %v1629 = vld [vmem:[#allocation6 + $0x50] sm:$0xff]
    %v1630 = vld [vmem:[#allocation6 + $0x58] sm:$0xff]
    %v1631 = vld [vmem:[#allocation6 + $0x60] sm:$0xff]
    %v1632 = vld [vmem:[#allocation6 + $0x68] sm:$0xff]
    %v1633 = vld [vmem:[#allocation6 + $0x70] sm:$0xff]
    %v1634 = vld [vmem:[#allocation6 + $0x78] sm:$0xff]
    %v1635 = vld [vmem:[#allocation6 + $0x80] sm:$0xff]
    %v1636 = vld [vmem:[#allocation6 + $0x88] sm:$0xff]
    %v1637 = vld [vmem:[#allocation6 + $0x90] sm:$0xff]
    %v1638 = vld [vmem:[#allocation6 + $0x98] sm:$0xff]
    %v1639 = vld [vmem:[#allocation6 + $0xa0] sm:$0xff]
    %v1640 = vld [vmem:[#allocation6 + $0xa8] sm:$0xff]
    %v1641 = vld [vmem:[#allocation6 + $0xb0] sm:$0xff]
    %v1642 = vld [vmem:[#allocation6 + $0xb8] sm:$0xff]
    %v1643 = vld [vmem:[#allocation6 + $0xc0] sm:$0xff]
    %v1644 = vld [vmem:[#allocation6 + $0xc8] sm:$0xff]
    %v1645 = vld [vmem:[#allocation6 + $0xd0] sm:$0xff]
    %v1646 = vld [vmem:[#allocation6 + $0xd8] sm:$0xff]
    %v1647 = vld [vmem:[#allocation6 + $0xe0] sm:$0xff]
    %v1648 = vld [vmem:[#allocation6 + $0xe8] sm:$0xff]
    %v1649 = vld [vmem:[#allocation6 + $0xf0] sm:$0xff]
    %v1650 = vld [vmem:[#allocation6 + $0xf8] sm:$0xff]
    %v1651 = vld [vmem:[#allocation6 + $0x100] sm:$0xff]
    %v1652 = vld [vmem:[#allocation6 + $0x108] sm:$0xff]
    %v1653 = vld [vmem:[#allocation6 + $0x110] sm:$0xff]
    %v1654 = vld [vmem:[#allocation6 + $0x118] sm:$0xff]
    %v1655 = vld [vmem:[#allocation6 + $0x120] sm:$0xff]
    %v1656 = vld [vmem:[#allocation6 + $0x128] sm:$0xff]
    %v1657 = vld [vmem:[#allocation6 + $0x130] sm:$0xff]
    %v1658 = vld [vmem:[#allocation6 + $0x138] sm:$0xff]
    %v1659 = vld [vmem:[#allocation6 + $0x140] sm:$0xff]
    %v1660 = vld [vmem:[#allocation6 + $0x148] sm:$0xff]
    %v1661 = vld [vmem:[#allocation6 + $0x150] sm:$0xff]
    %v1662 = vld [vmem:[#allocation6 + $0x158] sm:$0xff]
    %v1663 = vld [vmem:[#allocation6 + $0x160] sm:$0xff]
    %v1664 = vld [vmem:[#allocation6 + $0x168] sm:$0xff]
    %v1665 = vld [vmem:[#allocation6 + $0x170] sm:$0xff]
    %v1666 = vld [vmem:[#allocation6 + $0x178] sm:$0xff]
    %1667 = vmatprep.subr.mxu0 %v1620
    %1668 = vmatpush1.msra.mxu0 %v1619
    %1669 = vmatprep.subr.mxu0 %v1623
    %1670 = vmatpush1.msra.mxu0 %v1622
    %1671 = vmatprep.subr.mxu0 %v1626
    %1672 = vmatpush1.msra.mxu0 %v1625
    %1673 = vmatprep.subr.mxu0 %v1629
    %1674 = vmatpush1.msra.mxu0 %v1628
    %1675 = vmatprep.subr.mxu0 %v1632
    %1676 = vmatpush1.msra.mxu0 %v1631
    %1677 = vmatprep.subr.mxu0 %v1635
    %1678 = vmatpush1.msra.mxu0 %v1634
    %1679 = vmatprep.subr.mxu0 %v1638
    %1680 = vmatpush1.msra.mxu0 %v1637
    %1681 = vmatprep.subr.mxu0 %v1641
    %1682 = vmatpush1.msra.mxu0 %v1640
    %1683 = vmatprep.subr.mxu0 %v1644
    %1684 = vmatpush1.msra.mxu0 %v1643
    %1685 = vmatprep.subr.mxu0 %v1647
    %1686 = vmatpush1.msra.mxu0 %v1646
    %1687 = vmatprep.subr.mxu0 %v1650
    %1688 = vmatpush1.msra.mxu0 %v1649
    %1689 = vmatprep.subr.mxu0 %v1653
    %1690 = vmatpush1.msra.mxu0 %v1652
    %1691 = vmatprep.subr.mxu0 %v1656
    %1692 = vmatpush1.msra.mxu0 %v1655
    %1693 = vmatprep.subr.mxu0 %v1659
    %1694 = vmatpush1.msra.mxu0 %v1658
    %1695 = vmatprep.subr.mxu0 %v1662
    %1696 = vmatpush1.msra.mxu0 %v1661
    %1697 = vmatprep.subr.mxu0 %v1665
    %1698 = vmatpush1.msra.mxu0 %v1664
    %1699 = vmatprep.subr.mxu0 0.0
    %1700 = vmatpush1.msra.mxu0 0.0
    %1701 = vmatprep.subr.mxu0 0.0
    %1702 = vmatpush1.msra.mxu0 0.0
    %1703 = vmatprep.subr.mxu0 0.0
    %1704 = vmatpush1.msra.mxu0 0.0
    %1705 = vmatprep.subr.mxu0 0.0
    %1706 = vmatpush1.msra.mxu0 0.0
    %1707 = vmatprep.subr.mxu0 0.0
    %1708 = vmatpush1.msra.mxu0 0.0
    %1709 = vmatprep.subr.mxu0 0.0
    %1710 = vmatpush1.msra.mxu0 0.0
    %1711 = vmatprep.subr.mxu0 0.0
    %1712 = vmatpush1.msra.mxu0 0.0
    %1713 = vmatprep.subr.mxu0 0.0
    %1714 = vmatpush1.msra.mxu0 0.0
    %1715 = vmatprep.subr.mxu0 0.0
    %1716 = vmatpush1.msra.mxu0 0.0
    %1717 = vmatprep.subr.mxu0 0.0
    %1718 = vmatpush1.msra.mxu0 0.0
    %1719 = vmatprep.subr.mxu0 0.0
    %1720 = vmatpush1.msra.mxu0 0.0
    %1721 = vmatprep.subr.mxu0 0.0
    %1722 = vmatpush1.msra.mxu0 0.0
    %1723 = vmatprep.subr.mxu0 0.0
    %1724 = vmatpush1.msra.mxu0 0.0
    %1725 = vmatprep.subr.mxu0 0.0
    %1726 = vmatpush1.msra.mxu0 0.0
    %1727 = vmatprep.subr.mxu0 0.0
    %1728 = vmatpush1.msra.mxu0 0.0
    %1729 = vmatprep.subr.mxu0 0.0
    %1730 = vmatpush1.msra.mxu0 0.0
    %1731 = vmatprep.mubr.f32.mxu0 0.0
    %1732 = vmatmul.mubr.f32.gmra.mrb[0].mxu0 %v1612
    %v1733 = vpop.f32.mrb[0].mxu0
    %v1734 = vadd.f32 0.0, %v1733
    %v1735 = vpop.f32.mrb[0].mxu0
    %v1736 = vadd.f32 0.0, %v1735
    %1737 = vdwg.mxu0
    %1738 = vmatprep.subr.mxu0 0.0
    %1739 = vmatpush1.msra.mxu0 %v1621
    %1740 = vmatprep.subr.mxu0 0.0
    %1741 = vmatpush1.msra.mxu0 %v1624
    %1742 = vmatprep.subr.mxu0 0.0
    %1743 = vmatpush1.msra.mxu0 %v1627
    %1744 = vmatprep.subr.mxu0 0.0
    %1745 = vmatpush1.msra.mxu0 %v1630
    %1746 = vmatprep.subr.mxu0 0.0
    %1747 = vmatpush1.msra.mxu0 %v1633
    %1748 = vmatprep.subr.mxu0 0.0
    %1749 = vmatpush1.msra.mxu0 %v1636
    %1750 = vmatprep.subr.mxu0 0.0
    %1751 = vmatpush1.msra.mxu0 %v1639
    %1752 = vmatprep.subr.mxu0 0.0
    %1753 = vmatpush1.msra.mxu0 %v1642
    %1754 = vmatprep.subr.mxu0 0.0
    %1755 = vmatpush1.msra.mxu0 %v1645
    %1756 = vmatprep.subr.mxu0 0.0
    %1757 = vmatpush1.msra.mxu0 %v1648
    %1758 = vmatprep.subr.mxu0 0.0
    %1759 = vmatpush1.msra.mxu0 %v1651
    %1760 = vmatprep.subr.mxu0 0.0
    %1761 = vmatpush1.msra.mxu0 %v1654
    %1762 = vmatprep.subr.mxu0 0.0
    %1763 = vmatpush1.msra.mxu0 %v1657
    %1764 = vmatprep.subr.mxu0 0.0
    %1765 = vmatpush1.msra.mxu0 %v1660
    %1766 = vmatprep.subr.mxu0 0.0
    %1767 = vmatpush1.msra.mxu0 %v1663
    %1768 = vmatprep.subr.mxu0 0.0
    %1769 = vmatpush1.msra.mxu0 %v1666
    %1770 = vmatprep.subr.mxu0 0.0
    %1771 = vmatpush1.msra.mxu0 0.0
    %1772 = vmatprep.subr.mxu0 0.0
    %1773 = vmatpush1.msra.mxu0 0.0
    %1774 = vmatprep.subr.mxu0 0.0
    %1775 = vmatpush1.msra.mxu0 0.0
    %1776 = vmatprep.subr.mxu0 0.0
    %1777 = vmatpush1.msra.mxu0 0.0
    %1778 = vmatprep.subr.mxu0 0.0
    %1779 = vmatpush1.msra.mxu0 0.0
    %1780 = vmatprep.subr.mxu0 0.0
    %1781 = vmatpush1.msra.mxu0 0.0
    %1782 = vmatprep.subr.mxu0 0.0
    %1783 = vmatpush1.msra.mxu0 0.0
    %1784 = vmatprep.subr.mxu0 0.0
    %1785 = vmatpush1.msra.mxu0 0.0
    %1786 = vmatprep.subr.mxu0 0.0
    %1787 = vmatpush1.msra.mxu0 0.0
    %1788 = vmatprep.subr.mxu0 0.0
    %1789 = vmatpush1.msra.mxu0 0.0
    %1790 = vmatprep.subr.mxu0 0.0
    %1791 = vmatpush1.msra.mxu0 0.0
    %1792 = vmatprep.subr.mxu0 0.0
    %1793 = vmatpush1.msra.mxu0 0.0
    %1794 = vmatprep.subr.mxu0 0.0
    %1795 = vmatpush1.msra.mxu0 0.0
    %1796 = vmatprep.subr.mxu0 0.0
    %1797 = vmatpush1.msra.mxu0 0.0
    %1798 = vmatprep.subr.mxu0 0.0
    %1799 = vmatpush1.msra.mxu0 0.0
    %1800 = vmatprep.subr.mxu0 0.0
    %1801 = vmatpush1.msra.mxu0 0.0
    %1802 = vmatprep.mubr.f32.mxu0 0.0
    %1803 = vmatmul.mubr.f32.gmra.mrb[0].mxu0 %v1612
    %v1804 = vpop.f32.mrb[0].mxu0
    %v1805 = vadd.f32 0.0, %v1804
    %v1806 = vpop.f32.mrb[0].mxu0
    %1807 = vdwg.mxu0
    %v1808 = vadd.f32 %v1616, %v1734
    %v1809 = vxor.u32 %v1808, 2147483648
    %v1810 = vmul.f32 %v1809, 1.442695
    %v1811 = vpow.pop %v1810
    %v1812 = vadd.f32 %v1811, 1.0
    %v1813 = vrcp.pop %v1812
    %v1814 = vmul.f32 1.0, %v1813
    %v1815 = vadd.f32 %v1617, %v1736
    %v1816 = vxor.u32 %v1815, 2147483648
    %v1817 = vmul.f32 %v1816, 1.442695
    %v1818 = vpow.pop %v1817
    %v1819 = vadd.f32 %v1818, 1.0
    %v1820 = vrcp.pop %v1819
    %v1821 = vmul.f32 1.0, %v1820
    %v1822 = vld [vmem:[%s2] sm:$0x1]
    %v1824 = vlaneseq
    %v1825 = vshrl.u32 %v1824, 7
    %v1826 = vsub.s32 0, %v1825
    %v1827 = vrot.slane %v1822, %v1826
    %v1829 = vadd.f32 %v1805, %v1827
    %v1830 = vmul.f32 %v1814, %v1829
    %v1831 = vadd.f32 %v1618, %v1830
    %v1832 = vtanh.pop %v1831
    %v1833 = vsub.f32 1.0, %v1821
    %v1834 = vmul.f32 %v1833, %v1832
    %v1835 = vmul.f32 %v1821, %v1612
    %v1836 = vadd.f32 %v1834, %v1835
    %s1837 = scalar_lea.vmem [#allocation8], 56
    %1838 = vst [vmem:[%s1837] sm:$0xff] %v1836
    %1839 = vst [vmem:[#allocation2] sm:$0xff] %v1836
    // Predicated region
    $region26: #{tpu_custom_call.1} parent=1 // pred_check
      _
    $region27: #{tpu_custom_call.1} parent=1 // pred_check_branch
      %1841 = sbr.rel (0) target = $region29
    $region28: #{tpu_custom_call.1} parent=1 // pred_region
      %s1843 = ssub.s32 1024, 1024
      %1844 = vsyncadd [#allocation5], %s1843
      %s1845 = sshll.u32 [#allocation8], 4
      %s1846 = int_to_ptr.vmem [resolvable:$true] %s1845
      %1851 = dma.vmem_to_hbm [thread:$0]  %s1846, 1024, %s3, [#allocation5], 128, 128, 8
    $region29: #{tpu_custom_call.1} parent=1 // pred_fallthru
      _
    // Predicated region
    $region30: #{tpu_custom_call.1} parent=1 // pred_check
      _
    $region31: #{tpu_custom_call.1} parent=1 // pred_check_branch
      %1853 = sbr.rel (0) target = $region33
    $region32: #{tpu_custom_call.1} parent=1 // pred_region
      %1854 = dma.done [#allocation5], 1024
    $region33: #{tpu_custom_call.1} parent=1 // pred_fallthru
      _
    %1855 = vsyncpa [#allocation4], 1
    %1856 = vsyncpa [#allocation7], 1
    %1857 = vsyncpa [#allocation5], 1

</llo_original>
